<compile_context>
chip_gen: v7x
topology: tpu7x:2x2x1
jax: 0.10.0
libtpu: 0.0.40
codegen_flags: <defaults>
</compile_context>

<pallas_src>
import jax
import jax.numpy as jnp
from jax.experimental import pallas as pl
from jax.experimental.pallas import tpu as pltpu


# ----------------------------------------------------------------------------
# Kernel: one (batch, HW-tile) block, NCHW-native layout.
# ----------------------------------------------------------------------------
def scse_kernel_nchw(x_ref, gate_ref, wt_ref, bs_ref, o_ref):
    # x_ref:    (C, tHW)  input dtype (f32/bf16); C on sublanes, HW on lanes
    # gate_ref: (C, 1)    f32  precomputed cSE gate for this batch element
    # wt_ref:   (C, C)    bf16 sSE 1x1-conv weight, pre-transposed: wt[o, i]
    # bs_ref:   (C, 1)    f32  sSE bias
    # o_ref:    (C, tHW)  same dtype as x
    x = x_ref[...]
    xb = x.astype(jnp.bfloat16)  # MXU input; cast fused here, no extra HBM pass

    # sSE: per-pixel 1x1 conv over channels -> MXU matmul, f32 accumulate.
    # s[o, p] = bias[o] + sum_i W[o, i] * x[i, p]
    s = jnp.dot(wt_ref[...], xb, preferred_element_type=jnp.float32) + bs_ref[...]

    # sigmoid via EUP: exp + approximate reciprocal (keeps VALU slots free).
    sse = pl.reciprocal(1.0 + jnp.exp(-s), approx=True)          # (C, tHW) f32

    # out = x * (cSE + sSE)   (== x*cSE + x*sSE)
    # Partial trailing HW blocks feed padded lanes through exp/recip; the
    # masked store discards them — intentional, do not "fix" into masked math.
    o_ref[...] = (x.astype(jnp.float32) * (gate_ref[...] + sse)).astype(o_ref.dtype)


# ----------------------------------------------------------------------------
# Wrapper helpers
# ----------------------------------------------------------------------------
def _scoped_vmem_limit():
    """~Half of physical VMEM (≈32 MiB on v7x, 64 MiB on v5e/v6e); 32 MiB fallback."""
    try:
        cap = int(pltpu.get_tpu_info().vmem_capacity_bytes)
        return min(cap // 2, 64 * 1024 * 1024)
    except Exception:
        return 32 * 1024 * 1024


def _choose_tile_hw(HW, C, x_itemsize, vmem_budget, pref=1024):
    """Pick the spatial (lane-axis) tile: full HW if small, else a multiple of
    128 sized so double-buffered x/out + f32 intermediates fit the budget."""

    def tile_bytes(t):
        return (4 * t * C * x_itemsize      # 2 x input bufs + 2 output bufs
                + 2 * t * C * 4             # f32 intermediates (s, sse)
                + t * C * 2                 # in-kernel bf16 copy of x
                + 2 * C * C * 2)            # double-buffered bf16 weight

    if HW <= 128 or (HW <= pref and tile_bytes(HW) <= vmem_budget):
        return HW                           # block == full dim -> always legal
    t = max(min((pref // 128) * 128, (HW // 128) * 128), 128)
    while t > 128 and tile_bytes(t) > vmem_budget:
        t = max(((t // 2) // 128) * 128, 128)
    return t


def scse_pallas(x_nchw, params, *, tile_hw=None, alias_input=False):
    """NCHW entry point matching the PyTorch module interface.
    If C is very ragged (not a multiple of 8) consider padding channels in the
    caller; the last (lane) dim here is the HW tile, so C only rides sublanes."""
    N, C, H, W = x_nchw.shape
    HW = H * W
    x_flat = x_nchw.reshape(N, C, HW)       # contiguous NCHW -> free reshape
    x_itemsize = jnp.dtype(x_flat.dtype).itemsize

    # cSE branch (global avg-pool + tiny MLP) hoisted to the wrapper; one read
    # of x with f32 accumulation, negligible compute.
    pooled = jnp.mean(x_flat, axis=2, dtype=jnp.float32)                 # (N, C)
    z1 = jnp.maximum(pooled @ params["w1"] + params["b1"], 0.0)          # (N, Cr)
    gate = jax.nn.sigmoid(z1 @ params["w2"] + params["b2"])              # (N, C)
    gate = gate.reshape(N, C, 1).astype(jnp.float32)

    # sSE weight pre-transposed so the kernel computes s = wt @ x_tile.
    wt = params["ws"].T.astype(jnp.bfloat16)                             # (C, C)
    bs = params["bs"].reshape(C, 1).astype(jnp.float32)                  # (C, 1)

    vmem_limit = _scoped_vmem_limit()
    if tile_hw is None:
        tile_hw = _choose_tile_hw(HW, C, x_itemsize, vmem_budget=(vmem_limit * 3) // 4)
    grid = (N, pl.cdiv(HW, tile_hw))

    cost = pl.CostEstimate(
        flops=2 * N * HW * C * C + 4 * N * HW * C,       # sSE matmul + elementwise
        transcendentals=N * HW * C,                      # exp for sigmoid
        bytes_accessed=2 * N * HW * C * x_itemsize       # x in + out
                       + C * C * 2 + N * C * 4 + C * 4)  # weight + gate + bias

    out_flat = pl.pallas_call(
        scse_kernel_nchw,
        out_shape=jax.ShapeDtypeStruct((N, C, HW), x_flat.dtype),
        grid=grid,
        in_specs=[
            pl.BlockSpec((pl.Squeezed(), C, tile_hw), lambda n, h: (n, 0, h)),  # x
            pl.BlockSpec((pl.Squeezed(), C, 1), lambda n, h: (n, 0, 0)),        # gate
            pl.BlockSpec((C, C), lambda n, h: (0, 0)),                          # wt
            pl.BlockSpec((C, 1), lambda n, h: (0, 0)),                          # bs
        ],
        out_specs=pl.BlockSpec((pl.Squeezed(), C, tile_hw), lambda n, h: (n, 0, h)),
        compiler_params=pltpu.CompilerParams(
            dimension_semantics=("parallel", "parallel"),
            vmem_limit_bytes=vmem_limit),
        cost_estimate=cost,
        input_output_aliases=({0: 0} if alias_input else {}),
    )(x_flat, gate, wt, bs)

    return out_flat.reshape(N, C, H, W)


# ----------------------------------------------------------------------------
# Plain-JAX reference (f32, PyTorch semantics) and synthetic params
# ----------------------------------------------------------------------------
def scse_reference(x_nchw, params):
    N, C, H, W = x_nchw.shape
    xf = x_nchw.reshape(N, C, H * W).astype(jnp.float32)
    pooled = jnp.mean(xf, axis=2)                                    # (N, C)
    z1 = jnp.maximum(pooled @ params["w1"] + params["b1"], 0.0)      # (N, Cr)
    cse = jax.nn.sigmoid(z1 @ params["w2"] + params["b2"])           # (N, C)
    sse = jax.nn.sigmoid(jnp.einsum("io,nip->nop", params["ws"], xf)
                         + params["bs"].reshape(1, C, 1))            # (N, C, HW)
    out = xf * cse[:, :, None] + xf * sse
    return out.reshape(N, C, H, W)


def init_params(key, ch, re=16):
    """Conv2d(cin, cout, 1) weights stored pre-transposed as (cin, cout) matrices."""
    cr = max(ch // re, 1)
    k1, k2, k3, k4, k5, k6 = jax.random.split(key, 6)
    scale = 0.1
    return {
        "w1": jax.random.normal(k1, (ch, cr), jnp.float32) * scale,
        "b1": jax.random.normal(k2, (1, cr), jnp.float32) * scale,
        "w2": jax.random.normal(k3, (cr, ch), jnp.float32) * scale,
        "b2": jax.random.normal(k4, (1, ch), jnp.float32) * scale,
        "ws": jax.random.normal(k5, (ch, ch), jnp.float32) * scale,
        "bs": jax.random.normal(k6, (1, ch), jnp.float32) * scale,
    }


if __name__ == "__main__":
    key = jax.random.PRNGKey(0)
    kx, kp = jax.random.split(key)

    # ch=128, re=16 -> hidden=8 (module needs ch >= re); H=W=32 -> HW=1024.
    N, C, H, W = 2, 128, 32, 32
    x = jax.random.normal(kx, (N, C, H, W), jnp.float32)
    params = init_params(kp, C, re=16)

    out = jax.block_until_ready(scse_pallas(x, params))
    ref = scse_reference(x, params)

    assert out.shape == (N, C, H, W)
    assert out.dtype == x.dtype
    err = float(jnp.max(jnp.abs(out.astype(jnp.float32) - ref)))
    # sSE matmul runs in bf16 with f32 accumulation + approx reciprocal.
    assert jnp.allclose(out.astype(jnp.float32), ref, atol=5e-2, rtol=2e-2), (
        f"mismatch vs reference: max abs err {err}")

    print("KERNEL_OK")
</pallas_src>

<mosaic_0001>
module attributes {stable_mosaic.version = 11 : i64} {
  func.func @scse_kernel_nchw(%arg0: i32, %arg1: i32, %arg2: memref<1x128x1024xf32, #tpu.memory_space<vmem>>, %arg3: memref<1x128x1xf32, #tpu.memory_space<vmem>>, %arg4: memref<128x128xbf16, #tpu.memory_space<vmem>>, %arg5: memref<128x1xf32, #tpu.memory_space<vmem>>, %arg6: memref<1x128x1024xf32, #tpu.memory_space<vmem>>) attributes {dimension_semantics = [#tpu.dimension_semantics<parallel>, #tpu.dimension_semantics<parallel>], iteration_bounds = array<i64: 2, 1>, scalar_prefetch = 0 : i64, scratch_operands = 0 : i64, tpu.core_type = #tpu.core_type<tc>, window_params = [{transform_indices = @transform_0, window_bounds = array<i64: 1, 128, 1024>}, {transform_indices = @transform_1, window_bounds = array<i64: 1, 128, 1>}, {pipeline_mode = #tpu.pipeline_mode<synchronous>, transform_indices = @transform_2, window_bounds = array<i64: 128, 128>}, {pipeline_mode = #tpu.pipeline_mode<synchronous>, transform_indices = @transform_3, window_bounds = array<i64: 128, 1>}, {transform_indices = @transform_4, window_bounds = array<i64: 1, 128, 1024>}]} {
    %c0 = arith.constant 0 : index
    %c0_0 = arith.constant 0 : index
    %c0_1 = arith.constant 0 : index
    %0 = vector.load %arg2[%c0, %c0_0, %c0_1] : memref<1x128x1024xf32, #tpu.memory_space<vmem>>, vector<1x128x1024xf32>
    %1 = vector.shape_cast %0 : vector<1x128x1024xf32> to vector<128x1024xf32>
    %2 = arith.truncf %1 : vector<128x1024xf32> to vector<128x1024xbf16>
    %c0_2 = arith.constant 0 : index
    %c0_3 = arith.constant 0 : index
    %3 = vector.load %arg4[%c0_2, %c0_3] : memref<128x128xbf16, #tpu.memory_space<vmem>>, vector<128x128xbf16>
    %cst = arith.constant dense<0.000000e+00> : vector<128x1024xf32>
    %4 = tpu.matmul %3, %2, %cst {dimension_numbers = #tpu.dot_dimension_numbers<[1], [0], [0], [1], [0, 0, 1, 1], [], []>} : vector<128x128xbf16>, vector<128x1024xbf16>, vector<128x1024xf32> -> vector<128x1024xf32>
    %c0_4 = arith.constant 0 : index
    %c0_5 = arith.constant 0 : index
    %5 = vector.load %arg5[%c0_4, %c0_5] : memref<128x1xf32, #tpu.memory_space<vmem>>, vector<128x1xf32>
    %6 = vector.broadcast %5 : vector<128x1xf32> to vector<128x1024xf32>
    %7 = arith.addf %4, %6 : vector<128x1024xf32>
    %cst_6 = arith.constant 0.000000e+00 : f32
    %8 = vector.broadcast %cst_6 : f32 to vector<128x1024xf32>
    %9 = arith.subf %8, %7 : vector<128x1024xf32>
    %10 = math.exp %9 : vector<128x1024xf32>
    %cst_7 = arith.constant 1.000000e+00 : f32
    %11 = vector.broadcast %cst_7 : f32 to vector<128x1024xf32>
    %12 = arith.addf %11, %10 : vector<128x1024xf32>
    %13 = tpu.reciprocal %12 {approx = true} : vector<128x1024xf32> -> vector<128x1024xf32>
    %c0_8 = arith.constant 0 : index
    %c0_9 = arith.constant 0 : index
    %c0_10 = arith.constant 0 : index
    %14 = vector.load %arg3[%c0_8, %c0_9, %c0_10] : memref<1x128x1xf32, #tpu.memory_space<vmem>>, vector<1x128x1xf32>
    %15 = vector.shape_cast %14 : vector<1x128x1xf32> to vector<128x1xf32>
    %16 = vector.broadcast %15 : vector<128x1xf32> to vector<128x1024xf32>
    %17 = arith.addf %16, %13 : vector<128x1024xf32>
    %18 = arith.mulf %1, %17 : vector<128x1024xf32>
    %c0_11 = arith.constant 0 : index
    %c0_12 = arith.constant 0 : index
    %c0_13 = arith.constant 0 : index
    %19 = vector.load %arg6[%c0_11, %c0_12, %c0_13] : memref<1x128x1024xf32, #tpu.memory_space<vmem>>, vector<1x128x1024xf32>
    %20 = vector.shape_cast %19 : vector<1x128x1024xf32> to vector<128x1024xf32>
    %21 = vector.shape_cast %18 : vector<128x1024xf32> to vector<1x128x1024xf32>
    tpu.vector_store %arg6[%c0_11, %c0_12, %c0_13], %21 {strides = array<i32>} : memref<1x128x1024xf32, #tpu.memory_space<vmem>>, vector<1x128x1024xf32>,
    return
  }
  func.func @transform_0(%arg0: i32, %arg1: i32) -> (i32, i32, i32) {
    %c0_i32 = arith.constant 0 : i32
    %c0_i32_0 = arith.constant 0 : i32
    return %arg0, %c0_i32, %arg1 : i32, i32, i32
  }
  func.func @transform_1(%arg0: i32, %arg1: i32) -> (i32, i32, i32) {
    %c0_i32 = arith.constant 0 : i32
    %c0_i32_0 = arith.constant 0 : i32
    %c0_i32_1 = arith.constant 0 : i32
    return %arg0, %c0_i32, %c0_i32_0 : i32, i32, i32
  }
  func.func @transform_2(%arg0: i32, %arg1: i32) -> (i32, i32) {
    %c0_i32 = arith.constant 0 : i32
    %c0_i32_0 = arith.constant 0 : i32
    %c0_i32_1 = arith.constant 0 : i32
    return %c0_i32, %c0_i32_0 : i32, i32
  }
  func.func @transform_3(%arg0: i32, %arg1: i32) -> (i32, i32) {
    %c0_i32 = arith.constant 0 : i32
    %c0_i32_0 = arith.constant 0 : i32
    %c0_i32_1 = arith.constant 0 : i32
    return %c0_i32, %c0_i32_0 : i32, i32
  }
  func.func @transform_4(%arg0: i32, %arg1: i32) -> (i32, i32, i32) {
    %c0_i32 = arith.constant 0 : i32
    %c0_i32_0 = arith.constant 0 : i32
    return %arg0, %c0_i32, %arg1 : i32, i32, i32
  }
}

</mosaic_0001>

<llo_original>
// kernel: tpu_custom_call.1
$region0: #{tpu_custom_call.1}
  #allocation0 [shape = 'u32[]', space=smem, size = 0x4, offset = 0x4, fixed_abs, tag = 'smem constant byte address 0x4 - core index']
  #allocation1 [shape = 'u32[144,128]{1,0:T(1,128)}', space=vmem, size = 0x12000, scoped, tag = 'internal scratch']
  %s0 = inlined_call_operand.hbm [shape: f32[2,128,1024], index: 0, kind: input, shape index: {}]
  %s1 = inlined_call_operand.vmem [shape: f32[2,128,1], index: 1, kind: input, shape index: {}]
  %s2 = inlined_call_operand.vmem [shape: bf16[128,128], index: 2, kind: input, shape index: {}]
  %s3 = inlined_call_operand.vmem [shape: f32[128,1], index: 3, kind: input, shape index: {}]
  %s4 = inlined_call_operand.hbm [shape: f32[2,128,1024], index: 4, kind: output, shape index: {}]
  %s5 = sld [smem:[#allocation0]]
  $region53: #{tpu_custom_call.1} parent=0
    _
  %s7 = ssub.s32 1, %s5
  %s8 = scalar_select 0, %s7, %s5
  $region1: #{tpu_custom_call.1} parent=0
    #allocation2 [shape = 'u8[1048576]{0}', space=vmem, size = 0x100000, scoped, tag = 'input window, operand 0']
    #allocation3 [shape = 's32[2]{0}', space=sflag, size = 0x8, scoped, tag = 'scoped memory for tpu_custom_call.1']
    #allocation4 [shape = 's32[2]{0}', space=sflag, size = 0x8, scoped, tag = 'scoped memory for tpu_custom_call.1']
    #allocation5 [shape = 'u8[1048576]{0}', space=vmem, size = 0x100000, scoped, tag = 'output window, operand 0']
    %9 = vsyncpa [#allocation3], 0
    %s10 = scalar_lea.sflag [#allocation3], 1
    %11 = vsyncpa %s10, 0
    %12 = vsyncpa [#allocation4], 0
    %s13 = scalar_lea.sflag [#allocation4], 1
    %14 = vsyncpa %s13, 0
    loop: start=0, step=1, limit=4
    $region2: #{tpu_custom_call.1} parent=1 // loop_pre_header
      _
    $region3: #{tpu_custom_call.1} parent=1 // loop_header
      %s16 = sphi 0, %s20
      %p17 = scmp.ge.s32.totalorder %s16, 4
      %s23 = sphi 0, %s35
      %s24 = sphi 0, %s31
      %s25 = sphi 0, %s23
      %s26 = sphi 0, %s24
      %s27 = sphi 0, %s25
      %s28 = sphi 0, %s26
      %s40 = sphi 0, %s42
      %s43 = sphi 0, %s40
      %s44 = sphi 0, %s43
      %s60 = sphi 0, %s44
      %s66 = sphi 0, %s68
      %s69 = sphi 0, %s66
      %s70 = sphi 0, %s69
      %s86 = sphi 0, %s70
      %s90 = sphi 0, %s90
      %s92 = sphi 0, %s90
      %s93 = sphi 0, %s92
      %s107 = sphi 0, %s93
      %s111 = sphi 0, %s111
      %s113 = sphi 0, %s111
      %s114 = sphi 0, %s113
      %s128 = sphi 0, %s114
      %s136 = sphi 0, %s138
      %s139 = sphi 0, %s136
      %s140 = sphi 0, %s139
      %s156 = sphi 0, %s140
    $region4: #{tpu_custom_call.1} parent=1 // loop_header_branch
      %19 = sbr.rel (%p17) target = $region8
    $region5: #{tpu_custom_call.1} parent=1 // loop_body
      %s21 = ssub.s32 %s16, 1
      %s22 = ssub.s32 %s16, 2
      %s29 = sadd.s32 1, %s24
      %p30 = scmp.ge.s32.totalorder %s29, 1
      %s31 = scalar_select %p30, 0, %s29
      %s32 = sadd.s32 1, %s23
      %s33 = scalar_select %p30, %s32, %s23
      %p34 = scmp.ge.s32.totalorder %s33, 2
      %s35 = scalar_select %p34, 0, %s33
      %s36 = ssub.s32 %s23, %s35
      %s37 = ssub.s32 %s24, %s31
      %s38 = sor.u32 %s36, %s37
      %p39 = scmp.eq.s32.totalorder %s38, 0
      %s41 = sadd.s32 %s40, 1
      %s42 = scalar_select %p39, %s40, %s41
      %p45 = pneg %p39
      %p46 = scmp.eq.s32.totalorder %s16, 1
      %p47 = por %p45, %p46
      %p48 = scmp.ne.s32.totalorder %s40, %s43
      %p49 = scmp.eq.s32.totalorder %s16, 0
      %p50 = por %p48, %p49
      %p51 = scmp.ne.s32.totalorder %s40, %s43
      %p52 = scmp.eq.s32.totalorder %s21, 1
      %p53 = por %p51, %p52
      %p54 = scmp.ne.s32.totalorder %s43, %s44
      %p55 = scmp.eq.s32.totalorder %s21, 0
      %p56 = por %p54, %p55
      %p57 = scmp.ne.s32.totalorder %s43, %s44
      %p58 = scmp.eq.s32.totalorder %s22, 1
      %p59 = por %p57, %p58
      %p61 = scmp.ne.s32.totalorder %s44, %s60
      %p62 = scmp.eq.s32.totalorder %s22, 0
      %p63 = por %p61, %p62
      %s64 = ssub.s32 %s23, %s35
      %p65 = scmp.eq.s32.totalorder %s64, 0
      %s67 = sadd.s32 %s66, 1
      %s68 = scalar_select %p65, %s66, %s67
      %p71 = pneg %p65
      %p72 = scmp.eq.s32.totalorder %s16, 1
      %p73 = por %p71, %p72
      %p74 = scmp.ne.s32.totalorder %s66, %s69
      %p75 = scmp.eq.s32.totalorder %s16, 0
      %p76 = por %p74, %p75
      %p77 = scmp.ne.s32.totalorder %s66, %s69
      %p78 = scmp.eq.s32.totalorder %s21, 1
      %p79 = por %p77, %p78
      %p80 = scmp.ne.s32.totalorder %s69, %s70
      %p81 = scmp.eq.s32.totalorder %s21, 0
      %p82 = por %p80, %p81
      %p83 = scmp.ne.s32.totalorder %s69, %s70
      %p84 = scmp.eq.s32.totalorder %s22, 1
      %p85 = por %p83, %p84
      %p87 = scmp.ne.s32.totalorder %s70, %s86
      %p88 = scmp.eq.s32.totalorder %s22, 0
      %p89 = por %p87, %p88
      %s91 = sadd.s32 %s90, 1
      %p94 = scmp.eq.s32.totalorder %s16, 1
      %p95 = scmp.ne.s32.totalorder %s90, %s92
      %p96 = scmp.eq.s32.totalorder %s16, 0
      %p97 = por %p95, %p96
      %p98 = scmp.ne.s32.totalorder %s90, %s92
      %p99 = scmp.eq.s32.totalorder %s21, 1
      %p100 = por %p98, %p99
      %p101 = scmp.ne.s32.totalorder %s92, %s93
      %p102 = scmp.eq.s32.totalorder %s21, 0
      %p103 = por %p101, %p102
      %p104 = scmp.ne.s32.totalorder %s92, %s93
      %p105 = scmp.eq.s32.totalorder %s22, 1
      %p106 = por %p104, %p105
      %p108 = scmp.ne.s32.totalorder %s93, %s107
      %p109 = scmp.eq.s32.totalorder %s22, 0
      %p110 = por %p108, %p109
      %s112 = sadd.s32 %s111, 1
      %p115 = scmp.eq.s32.totalorder %s16, 1
      %p116 = scmp.ne.s32.totalorder %s111, %s113
      %p117 = scmp.eq.s32.totalorder %s16, 0
      %p118 = por %p116, %p117
      %p119 = scmp.ne.s32.totalorder %s111, %s113
      %p120 = scmp.eq.s32.totalorder %s21, 1
      %p121 = por %p119, %p120
      %p122 = scmp.ne.s32.totalorder %s113, %s114
      %p123 = scmp.eq.s32.totalorder %s21, 0
      %p124 = por %p122, %p123
      %p125 = scmp.ne.s32.totalorder %s113, %s114
      %p126 = scmp.eq.s32.totalorder %s22, 1
      %p127 = por %p125, %p126
      %p129 = scmp.ne.s32.totalorder %s114, %s128
      %p130 = scmp.eq.s32.totalorder %s22, 0
      %p131 = por %p129, %p130
      %s132 = ssub.s32 %s23, %s35
      %s133 = ssub.s32 %s24, %s31
      %s134 = sor.u32 %s132, %s133
      %p135 = scmp.eq.s32.totalorder %s134, 0
      %s137 = sadd.s32 %s136, 1
      %s138 = scalar_select %p135, %s136, %s137
      %p141 = pneg %p135
      %p142 = scmp.eq.s32.totalorder %s16, 1
      %p143 = por %p141, %p142
      %p144 = scmp.ne.s32.totalorder %s136, %s139
      %p145 = scmp.eq.s32.totalorder %s16, 0
      %p146 = por %p144, %p145
      %p147 = scmp.ne.s32.totalorder %s136, %s139
      %p148 = scmp.eq.s32.totalorder %s21, 1
      %p149 = por %p147, %p148
      %p150 = scmp.ne.s32.totalorder %s139, %s140
      %p151 = scmp.eq.s32.totalorder %s21, 0
      %p152 = por %p150, %p151
      %p153 = scmp.ne.s32.totalorder %s139, %s140
      %p154 = scmp.eq.s32.totalorder %s22, 1
      %p155 = por %p153, %p154
      %p157 = scmp.ne.s32.totalorder %s140, %s156
      %p158 = scmp.eq.s32.totalorder %s22, 0
      %p159 = por %p157, %p158
      %p160 = scmp.le.s32.totalorder 1, %s16
      %p161 = scmp.lt.s32.totalorder %s16, 3
      %p162 = pnand %p160, %p161
      %p163 = pneg %p162
      // Predicated region
      $region9: #{tpu_custom_call.1} parent=5 // pred_check
        _
      $region10: #{tpu_custom_call.1} parent=5 // pred_check_branch
        %165 = sbr.rel (%p162) target = $region12
      $region11: #{tpu_custom_call.1} parent=5 // pred_region
        %s166 = ssub.s32 %s16, 1
        // Predicated region
        $region13: #{tpu_custom_call.1} parent=11 // pred_check
          %p167 = pneg %p103
        $region14: #{tpu_custom_call.1} parent=11 // pred_check_branch
          %169 = sbr.rel (%p167) target = $region16
        $region15: #{tpu_custom_call.1} parent=11 // pred_region
          _
        $region16: #{tpu_custom_call.1} parent=11 // pred_fallthru
          _
        // Predicated region
        $region17: #{tpu_custom_call.1} parent=11 // pred_check
          %p170 = pneg %p124
        $region18: #{tpu_custom_call.1} parent=11 // pred_check_branch
          %172 = sbr.rel (%p170) target = $region20
        $region19: #{tpu_custom_call.1} parent=11 // pred_region
          _
        $region20: #{tpu_custom_call.1} parent=11 // pred_fallthru
          _
      $region12: #{tpu_custom_call.1} parent=5 // pred_fallthru
        _
      %p173 = scmp.lt.s32.totalorder %s16, 2
      // Predicated region
      $region21: #{tpu_custom_call.1} parent=5 // pred_check
        %p174 = pneg %p173
      $region22: #{tpu_custom_call.1} parent=5 // pred_check_branch
        %176 = sbr.rel (%p174) target = $region24
      $region23: #{tpu_custom_call.1} parent=5 // pred_region
        // Predicated region
        $region25: #{tpu_custom_call.1} parent=23 // pred_check
          %p177 = pneg %p50
        $region26: #{tpu_custom_call.1} parent=23 // pred_check_branch
          %179 = sbr.rel (%p177) target = $region28
        $region27: #{tpu_custom_call.1} parent=23 // pred_region
          %s180 = sand.u32 %s40, 1
          %s181 = scalar_lea.sflag [#allocation3], %s180
          %s182 = sand.u32 %s40, 1
          %s183 = smul.addr %s182, 1024
          %s184 = scalar_lea.vmem [#allocation2], %s183
          %s185 = smul.u32 8, %s24
          %s187 = ssub.s32 16384, 16384
          %188 = vsyncadd %s181, %s187
          %s189 = smul.addr %s23, 128
          %s190 = sadd.s32 %s185, %s189
          %s191 = smul.addr %s190, 128
          %s192 = scalar_lea.hbm %s0, %s191
          %s193 = sshll.u32 %s184, 4
          %s194 = int_to_ptr.vmem [resolvable:$true] %s193
          %199 = dma.hbm_to_vmem [thread:$0]  %s192, 16384, %s194, %s181, 1024, 1024, 64
        $region28: #{tpu_custom_call.1} parent=23 // pred_fallthru
          _
        // Predicated region
        $region29: #{tpu_custom_call.1} parent=23 // pred_check
          %p200 = pneg %p76
        $region30: #{tpu_custom_call.1} parent=23 // pred_check_branch
          %202 = sbr.rel (%p200) target = $region32
        $region31: #{tpu_custom_call.1} parent=23 // pred_region
          %p203 = scmp.lt.s32.totalorder %s23, 1
          %s204 = scalar_select %p203, %s23, 1
          %s205 = smul.addr %s204, 16
          %s206 = smul.addr %s205, 8
          %s207 = scalar_lea.vmem %s1, %s206
        $region32: #{tpu_custom_call.1} parent=23 // pred_fallthru
          _
      $region24: #{tpu_custom_call.1} parent=5 // pred_fallthru
        _
      %p208 = scmp.le.s32.totalorder 1, %s16
      %p209 = scmp.lt.s32.totalorder %s16, 3
      %p210 = pnand %p208, %p209
      %p211 = pneg %p210
      // Predicated region
      $region33: #{tpu_custom_call.1} parent=5 // pred_check
        _
      $region34: #{tpu_custom_call.1} parent=5 // pred_check_branch
        %213 = sbr.rel (%p210) target = $region36
      $region35: #{tpu_custom_call.1} parent=5 // pred_region
        %s214 = ssub.s32 %s16, 1
        %s215 = sand.u32 %s43, 1
        %s216 = scalar_lea.sflag [#allocation3], %s215
        %s217 = sand.u32 %s43, 1
        %s218 = smul.addr %s217, 1024
        %s219 = scalar_lea.vmem [#allocation2], %s218
        // Predicated region
        $region37: #{tpu_custom_call.1} parent=35 // pred_check
          %p220 = pneg %p56
        $region38: #{tpu_custom_call.1} parent=35 // pred_check_branch
          %222 = sbr.rel (%p220) target = $region40
        $region39: #{tpu_custom_call.1} parent=35 // pred_region
          %223 = dma.done %s216, 16384
        $region40: #{tpu_custom_call.1} parent=35 // pred_fallthru
          _
        %s224 = sand.u32 %s43, 1
        %s225 = scalar_lea.sflag [#allocation3], %s224
        %s226 = sand.u32 %s43, 1
        %s227 = smul.addr %s226, 1024
        %s228 = scalar_lea.vmem [#allocation2], %s227
        %p229 = pneg %p56
        %p230 = pneg %p53
        %p231 = scmp.lt.s32.totalorder %s25, 1
        %s232 = scalar_select %p231, %s25, 1
        %s233 = smul.addr %s232, 16
        %s234 = smul.addr %s233, 8
        %s235 = scalar_lea.vmem %s1, %s234
        %p236 = pneg %p82
        %p237 = pneg %p79
        %p238 = pneg %p103
        %p239 = pneg %p100
        %p240 = pneg %p124
        %p241 = pneg %p121
        %p242 = pneg %p152
        %p243 = pneg %p149
        %s244 = sand.u32 %s139, 1
        %s245 = scalar_lea.sflag [#allocation4], %s244
        %s246 = sand.u32 %s139, 1
        %s247 = smul.addr %s246, 1024
        %s248 = scalar_lea.vmem [#allocation5], %s247
        %s249 = smul.u32 8, %s26
        %p250 = scmp.lt.s32.totalorder %s25, 1
        %s251 = scalar_select %p250, %s25, 1
        %s252 = smul.addr %s251, 16
        %s253 = smul.addr %s252, 8
        %s254 = scalar_lea.vmem %s1, %s253
        %s255 = smul.u32 8, %s26
        %v257 = vld [vmem:[%s219] sm:$0xff]
        %v258 = vld [vmem:[%s219 + $0x8] sm:$0xff]
        %v259 = vld [vmem:[%s219 + $0x10] sm:$0xff]
        %v260 = vld [vmem:[%s219 + $0x18] sm:$0xff]
        %v261 = vld [vmem:[%s219 + $0x20] sm:$0xff]
        %v262 = vld [vmem:[%s219 + $0x28] sm:$0xff]
        %v263 = vld [vmem:[%s219 + $0x30] sm:$0xff]
        %v264 = vld [vmem:[%s219 + $0x38] sm:$0xff]
        %v265 = vld [vmem:[%s219 + $0x40] sm:$0xff]
        %v266 = vld [vmem:[%s219 + $0x48] sm:$0xff]
        %v267 = vld [vmem:[%s219 + $0x50] sm:$0xff]
        %v268 = vld [vmem:[%s219 + $0x58] sm:$0xff]
        %v269 = vld [vmem:[%s219 + $0x60] sm:$0xff]
        %v270 = vld [vmem:[%s219 + $0x68] sm:$0xff]
        %v271 = vld [vmem:[%s219 + $0x70] sm:$0xff]
        %v272 = vld [vmem:[%s219 + $0x78] sm:$0xff]
        %v273 = vld [vmem:[%s219 + $0x80] sm:$0xff]
        %v274 = vld [vmem:[%s219 + $0x88] sm:$0xff]
        %v275 = vld [vmem:[%s219 + $0x90] sm:$0xff]
        %v276 = vld [vmem:[%s219 + $0x98] sm:$0xff]
        %v277 = vld [vmem:[%s219 + $0xa0] sm:$0xff]
        %v278 = vld [vmem:[%s219 + $0xa8] sm:$0xff]
        %v279 = vld [vmem:[%s219 + $0xb0] sm:$0xff]
        %v280 = vld [vmem:[%s219 + $0xb8] sm:$0xff]
        %v281 = vld [vmem:[%s219 + $0xc0] sm:$0xff]
        %v282 = vld [vmem:[%s219 + $0xc8] sm:$0xff]
        %v283 = vld [vmem:[%s219 + $0xd0] sm:$0xff]
        %v284 = vld [vmem:[%s219 + $0xd8] sm:$0xff]
        %v285 = vld [vmem:[%s219 + $0xe0] sm:$0xff]
        %v286 = vld [vmem:[%s219 + $0xe8] sm:$0xff]
        %v287 = vld [vmem:[%s219 + $0xf0] sm:$0xff]
        %v288 = vld [vmem:[%s219 + $0xf8] sm:$0xff]
        %v289 = vld [vmem:[%s219 + $0x100] sm:$0xff]
        %v290 = vld [vmem:[%s219 + $0x108] sm:$0xff]
        %v291 = vld [vmem:[%s219 + $0x110] sm:$0xff]
        %v292 = vld [vmem:[%s219 + $0x118] sm:$0xff]
        %v293 = vld [vmem:[%s219 + $0x120] sm:$0xff]
        %v294 = vld [vmem:[%s219 + $0x128] sm:$0xff]
        %v295 = vld [vmem:[%s219 + $0x130] sm:$0xff]
        %v296 = vld [vmem:[%s219 + $0x138] sm:$0xff]
        %v297 = vld [vmem:[%s219 + $0x140] sm:$0xff]
        %v298 = vld [vmem:[%s219 + $0x148] sm:$0xff]
        %v299 = vld [vmem:[%s219 + $0x150] sm:$0xff]
        %v300 = vld [vmem:[%s219 + $0x158] sm:$0xff]
        %v301 = vld [vmem:[%s219 + $0x160] sm:$0xff]
        %v302 = vld [vmem:[%s219 + $0x168] sm:$0xff]
        %v303 = vld [vmem:[%s219 + $0x170] sm:$0xff]
        %v304 = vld [vmem:[%s219 + $0x178] sm:$0xff]
        %v305 = vld [vmem:[%s219 + $0x180] sm:$0xff]
        %v306 = vld [vmem:[%s219 + $0x188] sm:$0xff]
        %v307 = vld [vmem:[%s219 + $0x190] sm:$0xff]
        %v308 = vld [vmem:[%s219 + $0x198] sm:$0xff]
        %v309 = vld [vmem:[%s219 + $0x1a0] sm:$0xff]
        %v310 = vld [vmem:[%s219 + $0x1a8] sm:$0xff]
        %v311 = vld [vmem:[%s219 + $0x1b0] sm:$0xff]
        %v312 = vld [vmem:[%s219 + $0x1b8] sm:$0xff]
        %v313 = vld [vmem:[%s219 + $0x1c0] sm:$0xff]
        %v314 = vld [vmem:[%s219 + $0x1c8] sm:$0xff]
        %v315 = vld [vmem:[%s219 + $0x1d0] sm:$0xff]
        %v316 = vld [vmem:[%s219 + $0x1d8] sm:$0xff]
        %v317 = vld [vmem:[%s219 + $0x1e0] sm:$0xff]
        %v318 = vld [vmem:[%s219 + $0x1e8] sm:$0xff]
        %v319 = vld [vmem:[%s219 + $0x1f0] sm:$0xff]
        %v320 = vld [vmem:[%s219 + $0x1f8] sm:$0xff]
        %v321 = vld [vmem:[%s219 + $0x200] sm:$0xff]
        %v322 = vld [vmem:[%s219 + $0x208] sm:$0xff]
        %v323 = vld [vmem:[%s219 + $0x210] sm:$0xff]
        %v324 = vld [vmem:[%s219 + $0x218] sm:$0xff]
        %v325 = vld [vmem:[%s219 + $0x220] sm:$0xff]
        %v326 = vld [vmem:[%s219 + $0x228] sm:$0xff]
        %v327 = vld [vmem:[%s219 + $0x230] sm:$0xff]
        %v328 = vld [vmem:[%s219 + $0x238] sm:$0xff]
        %v329 = vld [vmem:[%s219 + $0x240] sm:$0xff]
        %v330 = vld [vmem:[%s219 + $0x248] sm:$0xff]
        %v331 = vld [vmem:[%s219 + $0x250] sm:$0xff]
        %v332 = vld [vmem:[%s219 + $0x258] sm:$0xff]
        %v333 = vld [vmem:[%s219 + $0x260] sm:$0xff]
        %v334 = vld [vmem:[%s219 + $0x268] sm:$0xff]
        %v335 = vld [vmem:[%s219 + $0x270] sm:$0xff]
        %v336 = vld [vmem:[%s219 + $0x278] sm:$0xff]
        %v337 = vld [vmem:[%s219 + $0x280] sm:$0xff]
        %v338 = vld [vmem:[%s219 + $0x288] sm:$0xff]
        %v339 = vld [vmem:[%s219 + $0x290] sm:$0xff]
        %v340 = vld [vmem:[%s219 + $0x298] sm:$0xff]
        %v341 = vld [vmem:[%s219 + $0x2a0] sm:$0xff]
        %v342 = vld [vmem:[%s219 + $0x2a8] sm:$0xff]
        %v343 = vld [vmem:[%s219 + $0x2b0] sm:$0xff]
        %v344 = vld [vmem:[%s219 + $0x2b8] sm:$0xff]
        %v345 = vld [vmem:[%s219 + $0x2c0] sm:$0xff]
        %v346 = vld [vmem:[%s219 + $0x2c8] sm:$0xff]
        %v347 = vld [vmem:[%s219 + $0x2d0] sm:$0xff]
        %v348 = vld [vmem:[%s219 + $0x2d8] sm:$0xff]
        %v349 = vld [vmem:[%s219 + $0x2e0] sm:$0xff]
        %v350 = vld [vmem:[%s219 + $0x2e8] sm:$0xff]
        %v351 = vld [vmem:[%s219 + $0x2f0] sm:$0xff]
        %v352 = vld [vmem:[%s219 + $0x2f8] sm:$0xff]
        %v353 = vld [vmem:[%s219 + $0x300] sm:$0xff]
        %v354 = vld [vmem:[%s219 + $0x308] sm:$0xff]
        %v355 = vld [vmem:[%s219 + $0x310] sm:$0xff]
        %v356 = vld [vmem:[%s219 + $0x318] sm:$0xff]
        %v357 = vld [vmem:[%s219 + $0x320] sm:$0xff]
        %v358 = vld [vmem:[%s219 + $0x328] sm:$0xff]
        %v359 = vld [vmem:[%s219 + $0x330] sm:$0xff]
        %v360 = vld [vmem:[%s219 + $0x338] sm:$0xff]
        %v361 = vld [vmem:[%s219 + $0x340] sm:$0xff]
        %v362 = vld [vmem:[%s219 + $0x348] sm:$0xff]
        %v363 = vld [vmem:[%s219 + $0x350] sm:$0xff]
        %v364 = vld [vmem:[%s219 + $0x358] sm:$0xff]
        %v365 = vld [vmem:[%s219 + $0x360] sm:$0xff]
        %v366 = vld [vmem:[%s219 + $0x368] sm:$0xff]
        %v367 = vld [vmem:[%s219 + $0x370] sm:$0xff]
        %v368 = vld [vmem:[%s219 + $0x378] sm:$0xff]
        %v369 = vld [vmem:[%s219 + $0x380] sm:$0xff]
        %v370 = vld [vmem:[%s219 + $0x388] sm:$0xff]
        %v371 = vld [vmem:[%s219 + $0x390] sm:$0xff]
        %v372 = vld [vmem:[%s219 + $0x398] sm:$0xff]
        %v373 = vld [vmem:[%s219 + $0x3a0] sm:$0xff]
        %v374 = vld [vmem:[%s219 + $0x3a8] sm:$0xff]
        %v375 = vld [vmem:[%s219 + $0x3b0] sm:$0xff]
        %v376 = vld [vmem:[%s219 + $0x3b8] sm:$0xff]
        %v377 = vld [vmem:[%s219 + $0x3c0] sm:$0xff]
        %v378 = vld [vmem:[%s219 + $0x3c8] sm:$0xff]
        %v379 = vld [vmem:[%s219 + $0x3d0] sm:$0xff]
        %v380 = vld [vmem:[%s219 + $0x3d8] sm:$0xff]
        %v381 = vld [vmem:[%s219 + $0x3e0] sm:$0xff]
        %v382 = vld [vmem:[%s219 + $0x3e8] sm:$0xff]
        %v383 = vld [vmem:[%s219 + $0x3f0] sm:$0xff]
        %v384 = vld [vmem:[%s219 + $0x3f8] sm:$0xff]
        %v385 = vpack.c.bf16 %v265, %v257
        %v386 = vpack.c.bf16 %v266, %v258
        %v387 = vpack.c.bf16 %v267, %v259
        %v388 = vpack.c.bf16 %v268, %v260
        %v389 = vpack.c.bf16 %v269, %v261
        %v390 = vpack.c.bf16 %v270, %v262
        %v391 = vpack.c.bf16 %v271, %v263
        %v392 = vpack.c.bf16 %v272, %v264
        %v393 = vpack.c.bf16 %v281, %v273
        %v394 = vpack.c.bf16 %v282, %v274
        %v395 = vpack.c.bf16 %v283, %v275
        %v396 = vpack.c.bf16 %v284, %v276
        %v397 = vpack.c.bf16 %v285, %v277
        %v398 = vpack.c.bf16 %v286, %v278
        %v399 = vpack.c.bf16 %v287, %v279
        %v400 = vpack.c.bf16 %v288, %v280
        %v401 = vpack.c.bf16 %v297, %v289
        %v402 = vpack.c.bf16 %v298, %v290
        %v403 = vpack.c.bf16 %v299, %v291
        %v404 = vpack.c.bf16 %v300, %v292
        %v405 = vpack.c.bf16 %v301, %v293
        %v406 = vpack.c.bf16 %v302, %v294
        %v407 = vpack.c.bf16 %v303, %v295
        %v408 = vpack.c.bf16 %v304, %v296
        %v409 = vpack.c.bf16 %v313, %v305
        %v410 = vpack.c.bf16 %v314, %v306
        %v411 = vpack.c.bf16 %v315, %v307
        %v412 = vpack.c.bf16 %v316, %v308
        %v413 = vpack.c.bf16 %v317, %v309
        %v414 = vpack.c.bf16 %v318, %v310
        %v415 = vpack.c.bf16 %v319, %v311
        %v416 = vpack.c.bf16 %v320, %v312
        %v417 = vpack.c.bf16 %v329, %v321
        %v418 = vpack.c.bf16 %v330, %v322
        %v419 = vpack.c.bf16 %v331, %v323
        %v420 = vpack.c.bf16 %v332, %v324
        %v421 = vpack.c.bf16 %v333, %v325
        %v422 = vpack.c.bf16 %v334, %v326
        %v423 = vpack.c.bf16 %v335, %v327
        %v424 = vpack.c.bf16 %v336, %v328
        %v425 = vpack.c.bf16 %v345, %v337
        %v426 = vpack.c.bf16 %v346, %v338
        %v427 = vpack.c.bf16 %v347, %v339
        %v428 = vpack.c.bf16 %v348, %v340
        %v429 = vpack.c.bf16 %v349, %v341
        %v430 = vpack.c.bf16 %v350, %v342
        %v431 = vpack.c.bf16 %v351, %v343
        %v432 = vpack.c.bf16 %v352, %v344
        %v433 = vpack.c.bf16 %v361, %v353
        %v434 = vpack.c.bf16 %v362, %v354
        %v435 = vpack.c.bf16 %v363, %v355
        %v436 = vpack.c.bf16 %v364, %v356
        %v437 = vpack.c.bf16 %v365, %v357
        %v438 = vpack.c.bf16 %v366, %v358
        %v439 = vpack.c.bf16 %v367, %v359
        %v440 = vpack.c.bf16 %v368, %v360
        %v441 = vpack.c.bf16 %v377, %v369
        %v442 = vpack.c.bf16 %v378, %v370
        %v443 = vpack.c.bf16 %v379, %v371
        %v444 = vpack.c.bf16 %v380, %v372
        %v445 = vpack.c.bf16 %v381, %v373
        %v446 = vpack.c.bf16 %v382, %v374
        %v447 = vpack.c.bf16 %v383, %v375
        %v448 = vpack.c.bf16 %v384, %v376
        %v449 = vld [vmem:[%s2] sm:$0xf]
        %v450 = vld [vmem:[%s2 + $0x4] sm:$0xf]
        %v451 = vld [vmem:[%s2 + $0x8] sm:$0xf]
        %v452 = vld [vmem:[%s2 + $0xc] sm:$0xf]
        %v453 = vld [vmem:[%s2 + $0x10] sm:$0xf]
        %v454 = vld [vmem:[%s2 + $0x14] sm:$0xf]
        %v455 = vld [vmem:[%s2 + $0x18] sm:$0xf]
        %v456 = vld [vmem:[%s2 + $0x1c] sm:$0xf]
        %v457 = vld [vmem:[%s2 + $0x20] sm:$0xf]
        %v458 = vld [vmem:[%s2 + $0x24] sm:$0xf]
        %v459 = vld [vmem:[%s2 + $0x28] sm:$0xf]
        %v460 = vld [vmem:[%s2 + $0x2c] sm:$0xf]
        %v461 = vld [vmem:[%s2 + $0x30] sm:$0xf]
        %v462 = vld [vmem:[%s2 + $0x34] sm:$0xf]
        %v463 = vld [vmem:[%s2 + $0x38] sm:$0xf]
        %v464 = vld [vmem:[%s2 + $0x3c] sm:$0xf]
        %v465 = vld [vmem:[%s3] sm:$0xff]
        %v466 = vld [vmem:[%s3 + $0x8] sm:$0xff]
        %v467 = vld [vmem:[%s3 + $0x10] sm:$0xff]
        %v468 = vld [vmem:[%s3 + $0x18] sm:$0xff]
        %v469 = vld [vmem:[%s3 + $0x20] sm:$0xff]
        %v470 = vld [vmem:[%s3 + $0x28] sm:$0xff]
        %v471 = vld [vmem:[%s3 + $0x30] sm:$0xff]
        %v472 = vld [vmem:[%s3 + $0x38] sm:$0xff]
        %v473 = vld [vmem:[%s3 + $0x40] sm:$0xff]
        %v474 = vld [vmem:[%s3 + $0x48] sm:$0xff]
        %v475 = vld [vmem:[%s3 + $0x50] sm:$0xff]
        %v476 = vld [vmem:[%s3 + $0x58] sm:$0xff]
        %v477 = vld [vmem:[%s3 + $0x60] sm:$0xff]
        %v478 = vld [vmem:[%s3 + $0x68] sm:$0xff]
        %v479 = vld [vmem:[%s3 + $0x70] sm:$0xff]
        %v480 = vld [vmem:[%s3 + $0x78] sm:$0xff]
        %482 = vset.pattern.permute.xlu0 0
        %483 = vperm.xlu0 %482, %v465
        %v484 = vpop.permute.xlu0 %483
        %487 = vset.pattern.permute.xlu0 0
        %488 = vperm.xlu0 %487, %v466
        %v489 = vpop.permute.xlu0 %488
        %492 = vset.pattern.permute.xlu0 0
        %493 = vperm.xlu0 %492, %v467
        %v494 = vpop.permute.xlu0 %493
        %497 = vset.pattern.permute.xlu0 0
        %498 = vperm.xlu0 %497, %v468
        %v499 = vpop.permute.xlu0 %498
        %502 = vset.pattern.permute.xlu0 0
        %503 = vperm.xlu0 %502, %v469
        %v504 = vpop.permute.xlu0 %503
        %507 = vset.pattern.permute.xlu0 0
        %508 = vperm.xlu0 %507, %v470
        %v509 = vpop.permute.xlu0 %508
        %512 = vset.pattern.permute.xlu0 0
        %513 = vperm.xlu0 %512, %v471
        %v514 = vpop.permute.xlu0 %513
        %517 = vset.pattern.permute.xlu0 0
        %518 = vperm.xlu0 %517, %v472
        %v519 = vpop.permute.xlu0 %518
        %522 = vset.pattern.permute.xlu0 0
        %523 = vperm.xlu0 %522, %v473
        %v524 = vpop.permute.xlu0 %523
        %527 = vset.pattern.permute.xlu0 0
        %528 = vperm.xlu0 %527, %v474
        %v529 = vpop.permute.xlu0 %528
        %532 = vset.pattern.permute.xlu0 0
        %533 = vperm.xlu0 %532, %v475
        %v534 = vpop.permute.xlu0 %533
        %537 = vset.pattern.permute.xlu0 0
        %538 = vperm.xlu0 %537, %v476
        %v539 = vpop.permute.xlu0 %538
        %542 = vset.pattern.permute.xlu0 0
        %543 = vperm.xlu0 %542, %v477
        %v544 = vpop.permute.xlu0 %543
        %547 = vset.pattern.permute.xlu0 0
        %548 = vperm.xlu0 %547, %v478
        %v549 = vpop.permute.xlu0 %548
        %552 = vset.pattern.permute.xlu0 0
        %553 = vperm.xlu0 %552, %v479
        %v554 = vpop.permute.xlu0 %553
        %557 = vset.pattern.permute.xlu0 0
        %558 = vperm.xlu0 %557, %v480
        %v559 = vpop.permute.xlu0 %558
        %v577 = vunpack.c.l.b16 %v449
        %v578 = vunpack.c.l.b16 %v450
        %v579 = vunpack.c.l.b16 %v451
        %v580 = vunpack.c.l.b16 %v452
        %v581 = vunpack.c.l.b16 %v453
        %v582 = vunpack.c.l.b16 %v454
        %v583 = vunpack.c.l.b16 %v455
        %v584 = vunpack.c.l.b16 %v456
        %v585 = vunpack.c.l.b16 %v457
        %v586 = vunpack.c.l.b16 %v458
        %v587 = vunpack.c.l.b16 %v459
        %v588 = vunpack.c.l.b16 %v460
        %v589 = vunpack.c.l.b16 %v461
        %v590 = vunpack.c.l.b16 %v462
        %v591 = vunpack.c.l.b16 %v463
        %v592 = vunpack.c.l.b16 %v464
        %v593 = vpack.c.b16 %v578, %v577
        %v594 = vpack.c.b16 %v580, %v579
        %v595 = vpack.c.b16 %v582, %v581
        %v596 = vpack.c.b16 %v584, %v583
        %v597 = vpack.c.b16 %v586, %v585
        %v598 = vpack.c.b16 %v588, %v587
        %v599 = vpack.c.b16 %v590, %v589
        %v600 = vpack.c.b16 %v592, %v591
        %609 = vmatprep.subr.bf16.mxu0 %v386
        %610 = vmatpush1.bf16.msra.mxu0 %v385
        %611 = vmatprep.subr.bf16.mxu0 %v394
        %612 = vmatpush1.bf16.msra.mxu0 %v393
        %613 = vmatprep.subr.bf16.mxu0 %v402
        %614 = vmatpush1.bf16.msra.mxu0 %v401
        %615 = vmatprep.subr.bf16.mxu0 %v410
        %616 = vmatpush1.bf16.msra.mxu0 %v409
        %617 = vmatprep.subr.bf16.mxu0 %v418
        %618 = vmatpush1.bf16.msra.mxu0 %v417
        %619 = vmatprep.subr.bf16.mxu0 %v426
        %620 = vmatpush1.bf16.msra.mxu0 %v425
        %621 = vmatprep.subr.bf16.mxu0 %v434
        %622 = vmatpush1.bf16.msra.mxu0 %v433
        %623 = vmatprep.subr.bf16.mxu0 %v442
        %624 = vmatpush1.bf16.msra.mxu0 %v441
        %625 = vmatprep.subr.bf16.mxu0 0
        %626 = vmatpush1.bf16.msra.mxu0 0
        %627 = vmatprep.subr.bf16.mxu0 0
        %628 = vmatpush1.bf16.msra.mxu0 0
        %629 = vmatprep.subr.bf16.mxu0 0
        %630 = vmatpush1.bf16.msra.mxu0 0
        %631 = vmatprep.subr.bf16.mxu0 0
        %632 = vmatpush1.bf16.msra.mxu0 0
        %633 = vmatprep.subr.bf16.mxu0 0
        %634 = vmatpush1.bf16.msra.mxu0 0
        %635 = vmatprep.subr.bf16.mxu0 0
        %636 = vmatpush1.bf16.msra.mxu0 0
        %637 = vmatprep.subr.bf16.mxu0 0
        %638 = vmatpush1.bf16.msra.mxu0 0
        %639 = vmatprep.subr.bf16.mxu0 0
        %640 = vmatpush1.bf16.msra.mxu0 0
        %641 = vmatprep.mubr.bf16.mxu0 0
        %642 = vmatmul.mubr.bf16.gmra.mrb[0].mxu0 %v593
        %v643 = vpop.f32.mrb[0].mxu0
        %v644 = vadd.f32 %v484, %v643
        %v645 = vpop.f32.mrb[0].mxu0
        %v646 = vadd.f32 %v484, %v645
        %v647 = vpop.f32.mrb[0].mxu0
        %v648 = vadd.f32 %v489, %v647
        %v649 = vpop.f32.mrb[0].mxu0
        %v650 = vadd.f32 %v489, %v649
        %651 = vmatprep.mubr.bf16.mxu0 0
        %652 = vmatmul.mubr.bf16.gmra.mrb[0].mxu0 %v594
        %v653 = vpop.f32.mrb[0].mxu0
        %v654 = vadd.f32 %v494, %v653
        %v655 = vpop.f32.mrb[0].mxu0
        %v656 = vadd.f32 %v494, %v655
        %v657 = vpop.f32.mrb[0].mxu0
        %v658 = vadd.f32 %v499, %v657
        %v659 = vpop.f32.mrb[0].mxu0
        %v660 = vadd.f32 %v499, %v659
        %661 = vmatprep.mubr.bf16.mxu0 0
        %662 = vmatmul.mubr.bf16.gmra.mrb[0].mxu0 %v595
        %v663 = vpop.f32.mrb[0].mxu0
        %v664 = vadd.f32 %v504, %v663
        %v665 = vpop.f32.mrb[0].mxu0
        %v666 = vadd.f32 %v504, %v665
        %v667 = vpop.f32.mrb[0].mxu0
        %v668 = vadd.f32 %v509, %v667
        %v669 = vpop.f32.mrb[0].mxu0
        %v670 = vadd.f32 %v509, %v669
        %671 = vmatprep.mubr.bf16.mxu0 0
        %672 = vmatmul.mubr.bf16.gmra.mrb[0].mxu0 %v596
        %v673 = vpop.f32.mrb[0].mxu0
        %v674 = vadd.f32 %v514, %v673
        %v675 = vpop.f32.mrb[0].mxu0
        %v676 = vadd.f32 %v514, %v675
        %v677 = vpop.f32.mrb[0].mxu0
        %v678 = vadd.f32 %v519, %v677
        %v679 = vpop.f32.mrb[0].mxu0
        %v680 = vadd.f32 %v519, %v679
        %681 = vmatprep.mubr.bf16.mxu0 0
        %682 = vmatmul.mubr.bf16.gmra.mrb[0].mxu0 %v597
        %v683 = vpop.f32.mrb[0].mxu0
        %v684 = vadd.f32 %v524, %v683
        %v685 = vpop.f32.mrb[0].mxu0
        %v686 = vadd.f32 %v524, %v685
        %v687 = vpop.f32.mrb[0].mxu0
        %v688 = vadd.f32 %v529, %v687
        %v689 = vpop.f32.mrb[0].mxu0
        %v690 = vadd.f32 %v529, %v689
        %691 = vmatprep.mubr.bf16.mxu0 0
        %692 = vmatmul.mubr.bf16.gmra.mrb[0].mxu0 %v598
        %v693 = vpop.f32.mrb[0].mxu0
        %v694 = vadd.f32 %v534, %v693
        %v695 = vpop.f32.mrb[0].mxu0
        %v696 = vadd.f32 %v534, %v695
        %v697 = vpop.f32.mrb[0].mxu0
        %v698 = vadd.f32 %v539, %v697
        %v699 = vpop.f32.mrb[0].mxu0
        %v700 = vadd.f32 %v539, %v699
        %701 = vmatprep.mubr.bf16.mxu0 0
        %702 = vmatmul.mubr.bf16.gmra.mrb[0].mxu0 %v599
        %v703 = vpop.f32.mrb[0].mxu0
        %v704 = vadd.f32 %v544, %v703
        %v705 = vpop.f32.mrb[0].mxu0
        %v706 = vadd.f32 %v544, %v705
        %v707 = vpop.f32.mrb[0].mxu0
        %v708 = vadd.f32 %v549, %v707
        %v709 = vpop.f32.mrb[0].mxu0
        %v710 = vadd.f32 %v549, %v709
        %711 = vmatprep.mubr.bf16.mxu0 0
        %712 = vmatmul.mubr.bf16.gmra.mrb[0].mxu0 %v600
        %v713 = vpop.f32.mrb[0].mxu0
        %v714 = vadd.f32 %v554, %v713
        %v715 = vpop.f32.mrb[0].mxu0
        %v716 = vadd.f32 %v554, %v715
        %v717 = vpop.f32.mrb[0].mxu0
        %v718 = vadd.f32 %v559, %v717
        %v719 = vpop.f32.mrb[0].mxu0
        %v720 = vadd.f32 %v559, %v719
        %721 = vdwg.mxu0
        %722 = vmatprep.subr.bf16.mxu0 %v388
        %723 = vmatpush1.bf16.msra.mxu0 %v387
        %724 = vmatprep.subr.bf16.mxu0 %v396
        %725 = vmatpush1.bf16.msra.mxu0 %v395
        %726 = vmatprep.subr.bf16.mxu0 %v404
        %727 = vmatpush1.bf16.msra.mxu0 %v403
        %728 = vmatprep.subr.bf16.mxu0 %v412
        %729 = vmatpush1.bf16.msra.mxu0 %v411
        %730 = vmatprep.subr.bf16.mxu0 %v420
        %731 = vmatpush1.bf16.msra.mxu0 %v419
        %732 = vmatprep.subr.bf16.mxu0 %v428
        %733 = vmatpush1.bf16.msra.mxu0 %v427
        %734 = vmatprep.subr.bf16.mxu0 %v436
        %735 = vmatpush1.bf16.msra.mxu0 %v435
        %736 = vmatprep.subr.bf16.mxu0 %v444
        %737 = vmatpush1.bf16.msra.mxu0 %v443
        %738 = vmatprep.subr.bf16.mxu0 0
        %739 = vmatpush1.bf16.msra.mxu0 0
        %740 = vmatprep.subr.bf16.mxu0 0
        %741 = vmatpush1.bf16.msra.mxu0 0
        %742 = vmatprep.subr.bf16.mxu0 0
        %743 = vmatpush1.bf16.msra.mxu0 0
        %744 = vmatprep.subr.bf16.mxu0 0
        %745 = vmatpush1.bf16.msra.mxu0 0
        %746 = vmatprep.subr.bf16.mxu0 0
        %747 = vmatpush1.bf16.msra.mxu0 0
        %748 = vmatprep.subr.bf16.mxu0 0
        %749 = vmatpush1.bf16.msra.mxu0 0
        %750 = vmatprep.subr.bf16.mxu0 0
        %751 = vmatpush1.bf16.msra.mxu0 0
        %752 = vmatprep.subr.bf16.mxu0 0
        %753 = vmatpush1.bf16.msra.mxu0 0
        %754 = vmatprep.mubr.bf16.mxu0 0
        %755 = vmatmul.mubr.bf16.gmra.mrb[0].mxu0 %v593
        %v756 = vpop.f32.mrb[0].mxu0
        %v757 = vadd.f32 %v484, %v756
        %v758 = vpop.f32.mrb[0].mxu0
        %v759 = vadd.f32 %v484, %v758
        %v760 = vpop.f32.mrb[0].mxu0
        %v761 = vadd.f32 %v489, %v760
        %v762 = vpop.f32.mrb[0].mxu0
        %v763 = vadd.f32 %v489, %v762
        %764 = vmatprep.mubr.bf16.mxu0 0
        %765 = vmatmul.mubr.bf16.gmra.mrb[0].mxu0 %v594
        %v766 = vpop.f32.mrb[0].mxu0
        %v767 = vadd.f32 %v494, %v766
        %v768 = vpop.f32.mrb[0].mxu0
        %v769 = vadd.f32 %v494, %v768
        %v770 = vpop.f32.mrb[0].mxu0
        %v771 = vadd.f32 %v499, %v770
        %v772 = vpop.f32.mrb[0].mxu0
        %v773 = vadd.f32 %v499, %v772
        %774 = vmatprep.mubr.bf16.mxu0 0
        %775 = vmatmul.mubr.bf16.gmra.mrb[0].mxu0 %v595
        %v776 = vpop.f32.mrb[0].mxu0
        %v777 = vadd.f32 %v504, %v776
        %v778 = vpop.f32.mrb[0].mxu0
        %v779 = vadd.f32 %v504, %v778
        %v780 = vpop.f32.mrb[0].mxu0
        %v781 = vadd.f32 %v509, %v780
        %v782 = vpop.f32.mrb[0].mxu0
        %v783 = vadd.f32 %v509, %v782
        %784 = vmatprep.mubr.bf16.mxu0 0
        %785 = vmatmul.mubr.bf16.gmra.mrb[0].mxu0 %v596
        %v786 = vpop.f32.mrb[0].mxu0
        %v787 = vadd.f32 %v514, %v786
        %v788 = vpop.f32.mrb[0].mxu0
        %v789 = vadd.f32 %v514, %v788
        %v790 = vpop.f32.mrb[0].mxu0
        %v791 = vadd.f32 %v519, %v790
        %v792 = vpop.f32.mrb[0].mxu0
        %v793 = vadd.f32 %v519, %v792
        %794 = vmatprep.mubr.bf16.mxu0 0
        %795 = vmatmul.mubr.bf16.gmra.mrb[0].mxu0 %v597
        %v796 = vpop.f32.mrb[0].mxu0
        %v797 = vadd.f32 %v524, %v796
        %v798 = vpop.f32.mrb[0].mxu0
        %v799 = vadd.f32 %v524, %v798
        %v800 = vpop.f32.mrb[0].mxu0
        %v801 = vadd.f32 %v529, %v800
        %v802 = vpop.f32.mrb[0].mxu0
        %v803 = vadd.f32 %v529, %v802
        %804 = vmatprep.mubr.bf16.mxu0 0
        %805 = vmatmul.mubr.bf16.gmra.mrb[0].mxu0 %v598
        %v806 = vpop.f32.mrb[0].mxu0
        %v807 = vadd.f32 %v534, %v806
        %v808 = vpop.f32.mrb[0].mxu0
        %v809 = vadd.f32 %v534, %v808
        %v810 = vpop.f32.mrb[0].mxu0
        %v811 = vadd.f32 %v539, %v810
        %v812 = vpop.f32.mrb[0].mxu0
        %v813 = vadd.f32 %v539, %v812
        %814 = vmatprep.mubr.bf16.mxu0 0
        %815 = vmatmul.mubr.bf16.gmra.mrb[0].mxu0 %v599
        %v816 = vpop.f32.mrb[0].mxu0
        %v817 = vadd.f32 %v544, %v816
        %v818 = vpop.f32.mrb[0].mxu0
        %v819 = vadd.f32 %v544, %v818
        %v820 = vpop.f32.mrb[0].mxu0
        %v821 = vadd.f32 %v549, %v820
        %v822 = vpop.f32.mrb[0].mxu0
        %v823 = vadd.f32 %v549, %v822
        %824 = vmatprep.mubr.bf16.mxu0 0
        %825 = vmatmul.mubr.bf16.gmra.mrb[0].mxu0 %v600
        %v826 = vpop.f32.mrb[0].mxu0
        %v827 = vadd.f32 %v554, %v826
        %v828 = vpop.f32.mrb[0].mxu0
        %v829 = vadd.f32 %v554, %v828
        %v830 = vpop.f32.mrb[0].mxu0
        %v831 = vadd.f32 %v559, %v830
        %v832 = vpop.f32.mrb[0].mxu0
        %v833 = vadd.f32 %v559, %v832
        %834 = vdwg.mxu0
        %835 = vmatprep.subr.bf16.mxu0 %v390
        %836 = vmatpush1.bf16.msra.mxu0 %v389
        %837 = vmatprep.subr.bf16.mxu0 %v398
        %838 = vmatpush1.bf16.msra.mxu0 %v397
        %839 = vmatprep.subr.bf16.mxu0 %v406
        %840 = vmatpush1.bf16.msra.mxu0 %v405
        %841 = vmatprep.subr.bf16.mxu0 %v414
        %842 = vmatpush1.bf16.msra.mxu0 %v413
        %843 = vmatprep.subr.bf16.mxu0 %v422
        %844 = vmatpush1.bf16.msra.mxu0 %v421
        %845 = vmatprep.subr.bf16.mxu0 %v430
        %846 = vmatpush1.bf16.msra.mxu0 %v429
        %847 = vmatprep.subr.bf16.mxu0 %v438
        %848 = vmatpush1.bf16.msra.mxu0 %v437
        %849 = vmatprep.subr.bf16.mxu0 %v446
        %850 = vmatpush1.bf16.msra.mxu0 %v445
        %851 = vmatprep.subr.bf16.mxu0 0
        %852 = vmatpush1.bf16.msra.mxu0 0
        %853 = vmatprep.subr.bf16.mxu0 0
        %854 = vmatpush1.bf16.msra.mxu0 0
        %855 = vmatprep.subr.bf16.mxu0 0
        %856 = vmatpush1.bf16.msra.mxu0 0
        %857 = vmatprep.subr.bf16.mxu0 0
        %858 = vmatpush1.bf16.msra.mxu0 0
        %859 = vmatprep.subr.bf16.mxu0 0
        %860 = vmatpush1.bf16.msra.mxu0 0
        %861 = vmatprep.subr.bf16.mxu0 0
        %862 = vmatpush1.bf16.msra.mxu0 0
        %863 = vmatprep.subr.bf16.mxu0 0
        %864 = vmatpush1.bf16.msra.mxu0 0
        %865 = vmatprep.subr.bf16.mxu0 0
        %866 = vmatpush1.bf16.msra.mxu0 0
        %867 = vmatprep.mubr.bf16.mxu0 0
        %868 = vmatmul.mubr.bf16.gmra.mrb[0].mxu0 %v593
        %v869 = vpop.f32.mrb[0].mxu0
        %v870 = vadd.f32 %v484, %v869
        %v871 = vpop.f32.mrb[0].mxu0
        %v872 = vadd.f32 %v484, %v871
        %v873 = vpop.f32.mrb[0].mxu0
        %v874 = vadd.f32 %v489, %v873
        %v875 = vpop.f32.mrb[0].mxu0
        %v876 = vadd.f32 %v489, %v875
        %877 = vmatprep.mubr.bf16.mxu0 0
        %878 = vmatmul.mubr.bf16.gmra.mrb[0].mxu0 %v594
        %v879 = vpop.f32.mrb[0].mxu0
        %v880 = vadd.f32 %v494, %v879
        %v881 = vpop.f32.mrb[0].mxu0
        %v882 = vadd.f32 %v494, %v881
        %v883 = vpop.f32.mrb[0].mxu0
        %v884 = vadd.f32 %v499, %v883
        %v885 = vpop.f32.mrb[0].mxu0
        %v886 = vadd.f32 %v499, %v885
        %887 = vmatprep.mubr.bf16.mxu0 0
        %888 = vmatmul.mubr.bf16.gmra.mrb[0].mxu0 %v595
        %v889 = vpop.f32.mrb[0].mxu0
        %v890 = vadd.f32 %v504, %v889
        %v891 = vpop.f32.mrb[0].mxu0
        %v892 = vadd.f32 %v504, %v891
        %v893 = vpop.f32.mrb[0].mxu0
        %v894 = vadd.f32 %v509, %v893
        %v895 = vpop.f32.mrb[0].mxu0
        %v896 = vadd.f32 %v509, %v895
        %897 = vmatprep.mubr.bf16.mxu0 0
        %898 = vmatmul.mubr.bf16.gmra.mrb[0].mxu0 %v596
        %v899 = vpop.f32.mrb[0].mxu0
        %v900 = vadd.f32 %v514, %v899
        %v901 = vpop.f32.mrb[0].mxu0
        %v902 = vadd.f32 %v514, %v901
        %v903 = vpop.f32.mrb[0].mxu0
        %v904 = vadd.f32 %v519, %v903
        %v905 = vpop.f32.mrb[0].mxu0
        %v906 = vadd.f32 %v519, %v905
        %907 = vmatprep.mubr.bf16.mxu0 0
        %908 = vmatmul.mubr.bf16.gmra.mrb[0].mxu0 %v597
        %v909 = vpop.f32.mrb[0].mxu0
        %v910 = vadd.f32 %v524, %v909
        %v911 = vpop.f32.mrb[0].mxu0
        %v912 = vadd.f32 %v524, %v911
        %v913 = vpop.f32.mrb[0].mxu0
        %v914 = vadd.f32 %v529, %v913
        %v915 = vpop.f32.mrb[0].mxu0
        %v916 = vadd.f32 %v529, %v915
        %917 = vmatprep.mubr.bf16.mxu0 0
        %918 = vmatmul.mubr.bf16.gmra.mrb[0].mxu0 %v598
        %v919 = vpop.f32.mrb[0].mxu0
        %v920 = vadd.f32 %v534, %v919
        %v921 = vpop.f32.mrb[0].mxu0
        %v922 = vadd.f32 %v534, %v921
        %v923 = vpop.f32.mrb[0].mxu0
        %v924 = vadd.f32 %v539, %v923
        %v925 = vpop.f32.mrb[0].mxu0
        %v926 = vadd.f32 %v539, %v925
        %927 = vmatprep.mubr.bf16.mxu0 0
        %928 = vmatmul.mubr.bf16.gmra.mrb[0].mxu0 %v599
        %v929 = vpop.f32.mrb[0].mxu0
        %v930 = vadd.f32 %v544, %v929
        %v931 = vpop.f32.mrb[0].mxu0
        %v932 = vadd.f32 %v544, %v931
        %v933 = vpop.f32.mrb[0].mxu0
        %v934 = vadd.f32 %v549, %v933
        %v935 = vpop.f32.mrb[0].mxu0
        %v936 = vadd.f32 %v549, %v935
        %937 = vmatprep.mubr.bf16.mxu0 0
        %938 = vmatmul.mubr.bf16.gmra.mrb[0].mxu0 %v600
        %v939 = vpop.f32.mrb[0].mxu0
        %v940 = vadd.f32 %v554, %v939
        %v941 = vpop.f32.mrb[0].mxu0
        %v942 = vadd.f32 %v554, %v941
        %v943 = vpop.f32.mrb[0].mxu0
        %v944 = vadd.f32 %v559, %v943
        %v945 = vpop.f32.mrb[0].mxu0
        %v946 = vadd.f32 %v559, %v945
        %947 = vdwg.mxu0
        %948 = vmatprep.subr.bf16.mxu0 %v392
        %949 = vmatpush1.bf16.msra.mxu0 %v391
        %950 = vmatprep.subr.bf16.mxu0 %v400
        %951 = vmatpush1.bf16.msra.mxu0 %v399
        %952 = vmatprep.subr.bf16.mxu0 %v408
        %953 = vmatpush1.bf16.msra.mxu0 %v407
        %954 = vmatprep.subr.bf16.mxu0 %v416
        %955 = vmatpush1.bf16.msra.mxu0 %v415
        %956 = vmatprep.subr.bf16.mxu0 %v424
        %957 = vmatpush1.bf16.msra.mxu0 %v423
        %958 = vmatprep.subr.bf16.mxu0 %v432
        %959 = vmatpush1.bf16.msra.mxu0 %v431
        %960 = vmatprep.subr.bf16.mxu0 %v440
        %961 = vmatpush1.bf16.msra.mxu0 %v439
        %962 = vmatprep.subr.bf16.mxu0 %v448
        %963 = vmatpush1.bf16.msra.mxu0 %v447
        %964 = vmatprep.subr.bf16.mxu0 0
        %965 = vmatpush1.bf16.msra.mxu0 0
        %966 = vmatprep.subr.bf16.mxu0 0
        %967 = vmatpush1.bf16.msra.mxu0 0
        %968 = vmatprep.subr.bf16.mxu0 0
        %969 = vmatpush1.bf16.msra.mxu0 0
        %970 = vmatprep.subr.bf16.mxu0 0
        %971 = vmatpush1.bf16.msra.mxu0 0
        %972 = vmatprep.subr.bf16.mxu0 0
        %973 = vmatpush1.bf16.msra.mxu0 0
        %974 = vmatprep.subr.bf16.mxu0 0
        %975 = vmatpush1.bf16.msra.mxu0 0
        %976 = vmatprep.subr.bf16.mxu0 0
        %977 = vmatpush1.bf16.msra.mxu0 0
        %978 = vmatprep.subr.bf16.mxu0 0
        %979 = vmatpush1.bf16.msra.mxu0 0
        %980 = vmatprep.mubr.bf16.mxu0 0
        %981 = vmatmul.mubr.bf16.gmra.mrb[0].mxu0 %v593
        %v982 = vpop.f32.mrb[0].mxu0
        %v983 = vadd.f32 %v484, %v982
        %v984 = vpop.f32.mrb[0].mxu0
        %v985 = vadd.f32 %v484, %v984
        %v986 = vpop.f32.mrb[0].mxu0
        %v987 = vadd.f32 %v489, %v986
        %v988 = vpop.f32.mrb[0].mxu0
        %v989 = vadd.f32 %v489, %v988
        %990 = vmatprep.mubr.bf16.mxu0 0
        %991 = vmatmul.mubr.bf16.gmra.mrb[0].mxu0 %v594
        %v992 = vpop.f32.mrb[0].mxu0
        %v993 = vadd.f32 %v494, %v992
        %v994 = vpop.f32.mrb[0].mxu0
        %v995 = vadd.f32 %v494, %v994
        %v996 = vpop.f32.mrb[0].mxu0
        %v997 = vadd.f32 %v499, %v996
        %v998 = vpop.f32.mrb[0].mxu0
        %v999 = vadd.f32 %v499, %v998
        %1000 = vmatprep.mubr.bf16.mxu0 0
        %1001 = vmatmul.mubr.bf16.gmra.mrb[0].mxu0 %v595
        %v1002 = vpop.f32.mrb[0].mxu0
        %v1003 = vadd.f32 %v504, %v1002
        %v1004 = vpop.f32.mrb[0].mxu0
        %v1005 = vadd.f32 %v504, %v1004
        %v1006 = vpop.f32.mrb[0].mxu0
        %v1007 = vadd.f32 %v509, %v1006
        %v1008 = vpop.f32.mrb[0].mxu0
        %v1009 = vadd.f32 %v509, %v1008
        %1010 = vmatprep.mubr.bf16.mxu0 0
        %1011 = vmatmul.mubr.bf16.gmra.mrb[0].mxu0 %v596
        %v1012 = vpop.f32.mrb[0].mxu0
        %v1013 = vadd.f32 %v514, %v1012
        %v1014 = vpop.f32.mrb[0].mxu0
        %v1015 = vadd.f32 %v514, %v1014
        %v1016 = vpop.f32.mrb[0].mxu0
        %v1017 = vadd.f32 %v519, %v1016
        %v1018 = vpop.f32.mrb[0].mxu0
        %v1019 = vadd.f32 %v519, %v1018
        %1020 = vmatprep.mubr.bf16.mxu0 0
        %1021 = vmatmul.mubr.bf16.gmra.mrb[0].mxu0 %v597
        %v1022 = vpop.f32.mrb[0].mxu0
        %v1023 = vadd.f32 %v524, %v1022
        %v1024 = vpop.f32.mrb[0].mxu0
        %v1025 = vadd.f32 %v524, %v1024
        %v1026 = vpop.f32.mrb[0].mxu0
        %v1027 = vadd.f32 %v529, %v1026
        %v1028 = vpop.f32.mrb[0].mxu0
        %v1029 = vadd.f32 %v529, %v1028
        %1030 = vmatprep.mubr.bf16.mxu0 0
        %1031 = vmatmul.mubr.bf16.gmra.mrb[0].mxu0 %v598
        %v1032 = vpop.f32.mrb[0].mxu0
        %v1033 = vadd.f32 %v534, %v1032
        %v1034 = vpop.f32.mrb[0].mxu0
        %v1035 = vadd.f32 %v534, %v1034
        %v1036 = vpop.f32.mrb[0].mxu0
        %v1037 = vadd.f32 %v539, %v1036
        %v1038 = vpop.f32.mrb[0].mxu0
        %v1039 = vadd.f32 %v539, %v1038
        %1040 = vmatprep.mubr.bf16.mxu0 0
        %1041 = vmatmul.mubr.bf16.gmra.mrb[0].mxu0 %v599
        %v1042 = vpop.f32.mrb[0].mxu0
        %v1043 = vadd.f32 %v544, %v1042
        %v1044 = vpop.f32.mrb[0].mxu0
        %v1045 = vadd.f32 %v544, %v1044
        %v1046 = vpop.f32.mrb[0].mxu0
        %v1047 = vadd.f32 %v549, %v1046
        %v1048 = vpop.f32.mrb[0].mxu0
        %v1049 = vadd.f32 %v549, %v1048
        %1050 = vmatprep.mubr.bf16.mxu0 0
        %1051 = vmatmul.mubr.bf16.gmra.mrb[0].mxu0 %v600
        %v1052 = vpop.f32.mrb[0].mxu0
        %v1053 = vadd.f32 %v554, %v1052
        %v1054 = vpop.f32.mrb[0].mxu0
        %v1055 = vadd.f32 %v554, %v1054
        %v1056 = vpop.f32.mrb[0].mxu0
        %v1057 = vadd.f32 %v559, %v1056
        %v1058 = vpop.f32.mrb[0].mxu0
        %v1059 = vadd.f32 %v559, %v1058
        %1060 = vdwg.mxu0
        %v1061 = vsub.f32 0.0, %v644
        %v1062 = vsub.f32 0.0, %v646
        %v1063 = vsub.f32 0.0, %v757
        %v1064 = vsub.f32 0.0, %v759
        %v1065 = vsub.f32 0.0, %v870
        %v1066 = vsub.f32 0.0, %v872
        %v1067 = vsub.f32 0.0, %v983
        %v1068 = vsub.f32 0.0, %v985
        %v1069 = vsub.f32 0.0, %v648
        %v1070 = vsub.f32 0.0, %v650
        %v1071 = vsub.f32 0.0, %v761
        %v1072 = vsub.f32 0.0, %v763
        %v1073 = vsub.f32 0.0, %v874
        %v1074 = vsub.f32 0.0, %v876
        %v1075 = vsub.f32 0.0, %v987
        %v1076 = vsub.f32 0.0, %v989
        %v1077 = vsub.f32 0.0, %v654
        %v1078 = vsub.f32 0.0, %v656
        %v1079 = vsub.f32 0.0, %v767
        %v1080 = vsub.f32 0.0, %v769
        %v1081 = vsub.f32 0.0, %v880
        %v1082 = vsub.f32 0.0, %v882
        %v1083 = vsub.f32 0.0, %v993
        %v1084 = vsub.f32 0.0, %v995
        %v1085 = vsub.f32 0.0, %v658
        %v1086 = vsub.f32 0.0, %v660
        %v1087 = vsub.f32 0.0, %v771
        %v1088 = vsub.f32 0.0, %v773
        %v1089 = vsub.f32 0.0, %v884
        %v1090 = vsub.f32 0.0, %v886
        %v1091 = vsub.f32 0.0, %v997
        %v1092 = vsub.f32 0.0, %v999
        %v1093 = vsub.f32 0.0, %v664
        %v1094 = vsub.f32 0.0, %v666
        %v1095 = vsub.f32 0.0, %v777
        %v1096 = vsub.f32 0.0, %v779
        %v1097 = vsub.f32 0.0, %v890
        %v1098 = vsub.f32 0.0, %v892
        %v1099 = vsub.f32 0.0, %v1003
        %v1100 = vsub.f32 0.0, %v1005
        %v1101 = vsub.f32 0.0, %v668
        %v1102 = vsub.f32 0.0, %v670
        %v1103 = vsub.f32 0.0, %v781
        %v1104 = vsub.f32 0.0, %v783
        %v1105 = vsub.f32 0.0, %v894
        %v1106 = vsub.f32 0.0, %v896
        %v1107 = vsub.f32 0.0, %v1007
        %v1108 = vsub.f32 0.0, %v1009
        %v1109 = vsub.f32 0.0, %v674
        %v1110 = vsub.f32 0.0, %v676
        %v1111 = vsub.f32 0.0, %v787
        %v1112 = vsub.f32 0.0, %v789
        %v1113 = vsub.f32 0.0, %v900
        %v1114 = vsub.f32 0.0, %v902
        %v1115 = vsub.f32 0.0, %v1013
        %v1116 = vsub.f32 0.0, %v1015
        %v1117 = vsub.f32 0.0, %v678
        %v1118 = vsub.f32 0.0, %v680
        %v1119 = vsub.f32 0.0, %v791
        %v1120 = vsub.f32 0.0, %v793
        %v1121 = vsub.f32 0.0, %v904
        %v1122 = vsub.f32 0.0, %v906
        %v1123 = vsub.f32 0.0, %v1017
        %v1124 = vsub.f32 0.0, %v1019
        %v1125 = vsub.f32 0.0, %v684
        %v1126 = vsub.f32 0.0, %v686
        %v1127 = vsub.f32 0.0, %v797
        %v1128 = vsub.f32 0.0, %v799
        %v1129 = vsub.f32 0.0, %v910
        %v1130 = vsub.f32 0.0, %v912
        %v1131 = vsub.f32 0.0, %v1023
        %v1132 = vsub.f32 0.0, %v1025
        %v1133 = vsub.f32 0.0, %v688
        %v1134 = vsub.f32 0.0, %v690
        %v1135 = vsub.f32 0.0, %v801
        %v1136 = vsub.f32 0.0, %v803
        %v1137 = vsub.f32 0.0, %v914
        %v1138 = vsub.f32 0.0, %v916
        %v1139 = vsub.f32 0.0, %v1027
        %v1140 = vsub.f32 0.0, %v1029
        %v1141 = vsub.f32 0.0, %v694
        %v1142 = vsub.f32 0.0, %v696
        %v1143 = vsub.f32 0.0, %v807
        %v1144 = vsub.f32 0.0, %v809
        %v1145 = vsub.f32 0.0, %v920
        %v1146 = vsub.f32 0.0, %v922
        %v1147 = vsub.f32 0.0, %v1033
        %v1148 = vsub.f32 0.0, %v1035
        %v1149 = vsub.f32 0.0, %v698
        %v1150 = vsub.f32 0.0, %v700
        %v1151 = vsub.f32 0.0, %v811
        %v1152 = vsub.f32 0.0, %v813
        %v1153 = vsub.f32 0.0, %v924
        %v1154 = vsub.f32 0.0, %v926
        %v1155 = vsub.f32 0.0, %v1037
        %v1156 = vsub.f32 0.0, %v1039
        %v1157 = vsub.f32 0.0, %v704
        %v1158 = vsub.f32 0.0, %v706
        %v1159 = vsub.f32 0.0, %v817
        %v1160 = vsub.f32 0.0, %v819
        %v1161 = vsub.f32 0.0, %v930
        %v1162 = vsub.f32 0.0, %v932
        %v1163 = vsub.f32 0.0, %v1043
        %v1164 = vsub.f32 0.0, %v1045
        %v1165 = vsub.f32 0.0, %v708
        %v1166 = vsub.f32 0.0, %v710
        %v1167 = vsub.f32 0.0, %v821
        %v1168 = vsub.f32 0.0, %v823
        %v1169 = vsub.f32 0.0, %v934
        %v1170 = vsub.f32 0.0, %v936
        %v1171 = vsub.f32 0.0, %v1047
        %v1172 = vsub.f32 0.0, %v1049
        %v1173 = vsub.f32 0.0, %v714
        %v1174 = vsub.f32 0.0, %v716
        %v1175 = vsub.f32 0.0, %v827
        %v1176 = vsub.f32 0.0, %v829
        %v1177 = vsub.f32 0.0, %v940
        %v1178 = vsub.f32 0.0, %v942
        %v1179 = vsub.f32 0.0, %v1053
        %v1180 = vsub.f32 0.0, %v1055
        %v1181 = vsub.f32 0.0, %v718
        %v1182 = vsub.f32 0.0, %v720
        %v1183 = vsub.f32 0.0, %v831
        %v1184 = vsub.f32 0.0, %v833
        %v1185 = vsub.f32 0.0, %v944
        %v1186 = vsub.f32 0.0, %v946
        %v1187 = vsub.f32 0.0, %v1057
        %v1188 = vsub.f32 0.0, %v1059
        %v1189 = vmul.f32 %v1061, 1.442695
        %v1190 = vpow.pop %v1189
        %v1191 = vmul.f32 %v1062, 1.442695
        %v1192 = vpow.pop %v1191
        %v1193 = vmul.f32 %v1063, 1.442695
        %v1194 = vpow.pop %v1193
        %v1195 = vmul.f32 %v1064, 1.442695
        %v1196 = vpow.pop %v1195
        %v1197 = vmul.f32 %v1065, 1.442695
        %v1198 = vpow.pop %v1197
        %v1199 = vmul.f32 %v1066, 1.442695
        %v1200 = vpow.pop %v1199
        %v1201 = vmul.f32 %v1067, 1.442695
        %v1202 = vpow.pop %v1201
        %v1203 = vmul.f32 %v1068, 1.442695
        %v1204 = vpow.pop %v1203
        %v1205 = vmul.f32 %v1069, 1.442695
        %v1206 = vpow.pop %v1205
        %v1207 = vmul.f32 %v1070, 1.442695
        %v1208 = vpow.pop %v1207
        %v1209 = vmul.f32 %v1071, 1.442695
        %v1210 = vpow.pop %v1209
        %v1211 = vmul.f32 %v1072, 1.442695
        %v1212 = vpow.pop %v1211
        %v1213 = vmul.f32 %v1073, 1.442695
        %v1214 = vpow.pop %v1213
        %v1215 = vmul.f32 %v1074, 1.442695
        %v1216 = vpow.pop %v1215
        %v1217 = vmul.f32 %v1075, 1.442695
        %v1218 = vpow.pop %v1217
        %v1219 = vmul.f32 %v1076, 1.442695
        %v1220 = vpow.pop %v1219
        %v1221 = vmul.f32 %v1077, 1.442695
        %v1222 = vpow.pop %v1221
        %v1223 = vmul.f32 %v1078, 1.442695
        %v1224 = vpow.pop %v1223
        %v1225 = vmul.f32 %v1079, 1.442695
        %v1226 = vpow.pop %v1225
        %v1227 = vmul.f32 %v1080, 1.442695
        %v1228 = vpow.pop %v1227
        %v1229 = vmul.f32 %v1081, 1.442695
        %v1230 = vpow.pop %v1229
        %v1231 = vmul.f32 %v1082, 1.442695
        %v1232 = vpow.pop %v1231
        %v1233 = vmul.f32 %v1083, 1.442695
        %v1234 = vpow.pop %v1233
        %v1235 = vmul.f32 %v1084, 1.442695
        %v1236 = vpow.pop %v1235
        %v1237 = vmul.f32 %v1085, 1.442695
        %v1238 = vpow.pop %v1237
        %v1239 = vmul.f32 %v1086, 1.442695
        %v1240 = vpow.pop %v1239
        %v1241 = vmul.f32 %v1087, 1.442695
        %v1242 = vpow.pop %v1241
        %v1243 = vmul.f32 %v1088, 1.442695
        %v1244 = vpow.pop %v1243
        %v1245 = vmul.f32 %v1089, 1.442695
        %v1246 = vpow.pop %v1245
        %v1247 = vmul.f32 %v1090, 1.442695
        %v1248 = vpow.pop %v1247
        %v1249 = vmul.f32 %v1091, 1.442695
        %v1250 = vpow.pop %v1249
        %v1251 = vmul.f32 %v1092, 1.442695
        %v1252 = vpow.pop %v1251
        %v1253 = vmul.f32 %v1093, 1.442695
        %v1254 = vpow.pop %v1253
        %v1255 = vmul.f32 %v1094, 1.442695
        %v1256 = vpow.pop %v1255
        %v1257 = vmul.f32 %v1095, 1.442695
        %v1258 = vpow.pop %v1257
        %v1259 = vmul.f32 %v1096, 1.442695
        %v1260 = vpow.pop %v1259
        %v1261 = vmul.f32 %v1097, 1.442695
        %v1262 = vpow.pop %v1261
        %v1263 = vmul.f32 %v1098, 1.442695
        %v1264 = vpow.pop %v1263
        %v1265 = vmul.f32 %v1099, 1.442695
        %v1266 = vpow.pop %v1265
        %v1267 = vmul.f32 %v1100, 1.442695
        %v1268 = vpow.pop %v1267
        %v1269 = vmul.f32 %v1101, 1.442695
        %v1270 = vpow.pop %v1269
        %v1271 = vmul.f32 %v1102, 1.442695
        %v1272 = vpow.pop %v1271
        %v1273 = vmul.f32 %v1103, 1.442695
        %v1274 = vpow.pop %v1273
        %v1275 = vmul.f32 %v1104, 1.442695
        %v1276 = vpow.pop %v1275
        %v1277 = vmul.f32 %v1105, 1.442695
        %v1278 = vpow.pop %v1277
        %v1279 = vmul.f32 %v1106, 1.442695
        %v1280 = vpow.pop %v1279
        %v1281 = vmul.f32 %v1107, 1.442695
        %v1282 = vpow.pop %v1281
        %v1283 = vmul.f32 %v1108, 1.442695
        %v1284 = vpow.pop %v1283
        %v1285 = vmul.f32 %v1109, 1.442695
        %v1286 = vpow.pop %v1285
        %v1287 = vmul.f32 %v1110, 1.442695
        %v1288 = vpow.pop %v1287
        %v1289 = vmul.f32 %v1111, 1.442695
        %v1290 = vpow.pop %v1289
        %v1291 = vmul.f32 %v1112, 1.442695
        %v1292 = vpow.pop %v1291
        %v1293 = vmul.f32 %v1113, 1.442695
        %v1294 = vpow.pop %v1293
        %v1295 = vmul.f32 %v1114, 1.442695
        %v1296 = vpow.pop %v1295
        %v1297 = vmul.f32 %v1115, 1.442695
        %v1298 = vpow.pop %v1297
        %v1299 = vmul.f32 %v1116, 1.442695
        %v1300 = vpow.pop %v1299
        %v1301 = vmul.f32 %v1117, 1.442695
        %v1302 = vpow.pop %v1301
        %v1303 = vmul.f32 %v1118, 1.442695
        %v1304 = vpow.pop %v1303
        %v1305 = vmul.f32 %v1119, 1.442695
        %v1306 = vpow.pop %v1305
        %v1307 = vmul.f32 %v1120, 1.442695
        %v1308 = vpow.pop %v1307
        %v1309 = vmul.f32 %v1121, 1.442695
        %v1310 = vpow.pop %v1309
        %v1311 = vmul.f32 %v1122, 1.442695
        %v1312 = vpow.pop %v1311
        %v1313 = vmul.f32 %v1123, 1.442695
        %v1314 = vpow.pop %v1313
        %v1315 = vmul.f32 %v1124, 1.442695
        %v1316 = vpow.pop %v1315
        %v1317 = vmul.f32 %v1125, 1.442695
        %v1318 = vpow.pop %v1317
        %v1319 = vmul.f32 %v1126, 1.442695
        %v1320 = vpow.pop %v1319
        %v1321 = vmul.f32 %v1127, 1.442695
        %v1322 = vpow.pop %v1321
        %v1323 = vmul.f32 %v1128, 1.442695
        %v1324 = vpow.pop %v1323
        %v1325 = vmul.f32 %v1129, 1.442695
        %v1326 = vpow.pop %v1325
        %v1327 = vmul.f32 %v1130, 1.442695
        %v1328 = vpow.pop %v1327
        %v1329 = vmul.f32 %v1131, 1.442695
        %v1330 = vpow.pop %v1329
        %v1331 = vmul.f32 %v1132, 1.442695
        %v1332 = vpow.pop %v1331
        %v1333 = vmul.f32 %v1133, 1.442695
        %v1334 = vpow.pop %v1333
        %v1335 = vmul.f32 %v1134, 1.442695
        %v1336 = vpow.pop %v1335
        %v1337 = vmul.f32 %v1135, 1.442695
        %v1338 = vpow.pop %v1337
        %v1339 = vmul.f32 %v1136, 1.442695
        %v1340 = vpow.pop %v1339
        %v1341 = vmul.f32 %v1137, 1.442695
        %v1342 = vpow.pop %v1341
        %v1343 = vmul.f32 %v1138, 1.442695
        %v1344 = vpow.pop %v1343
        %v1345 = vmul.f32 %v1139, 1.442695
        %v1346 = vpow.pop %v1345
        %v1347 = vmul.f32 %v1140, 1.442695
        %v1348 = vpow.pop %v1347
        %v1349 = vmul.f32 %v1141, 1.442695
        %v1350 = vpow.pop %v1349
        %v1351 = vmul.f32 %v1142, 1.442695
        %v1352 = vpow.pop %v1351
        %v1353 = vmul.f32 %v1143, 1.442695
        %v1354 = vpow.pop %v1353
        %v1355 = vmul.f32 %v1144, 1.442695
        %v1356 = vpow.pop %v1355
        %v1357 = vmul.f32 %v1145, 1.442695
        %v1358 = vpow.pop %v1357
        %v1359 = vmul.f32 %v1146, 1.442695
        %v1360 = vpow.pop %v1359
        %v1361 = vmul.f32 %v1147, 1.442695
        %v1362 = vpow.pop %v1361
        %v1363 = vmul.f32 %v1148, 1.442695
        %v1364 = vpow.pop %v1363
        %v1365 = vmul.f32 %v1149, 1.442695
        %v1366 = vpow.pop %v1365
        %v1367 = vmul.f32 %v1150, 1.442695
        %v1368 = vpow.pop %v1367
        %v1369 = vmul.f32 %v1151, 1.442695
        %v1370 = vpow.pop %v1369
        %v1371 = vmul.f32 %v1152, 1.442695
        %v1372 = vpow.pop %v1371
        %v1373 = vmul.f32 %v1153, 1.442695
        %v1374 = vpow.pop %v1373
        %v1375 = vmul.f32 %v1154, 1.442695
        %v1376 = vpow.pop %v1375
        %v1377 = vmul.f32 %v1155, 1.442695
        %v1378 = vpow.pop %v1377
        %v1379 = vmul.f32 %v1156, 1.442695
        %v1380 = vpow.pop %v1379
        %v1381 = vmul.f32 %v1157, 1.442695
        %v1382 = vpow.pop %v1381
        %v1383 = vmul.f32 %v1158, 1.442695
        %v1384 = vpow.pop %v1383
        %v1385 = vmul.f32 %v1159, 1.442695
        %v1386 = vpow.pop %v1385
        %v1387 = vmul.f32 %v1160, 1.442695
        %v1388 = vpow.pop %v1387
        %v1389 = vmul.f32 %v1161, 1.442695
        %v1390 = vpow.pop %v1389
        %v1391 = vmul.f32 %v1162, 1.442695
        %v1392 = vpow.pop %v1391
        %v1393 = vmul.f32 %v1163, 1.442695
        %v1394 = vpow.pop %v1393
        %v1395 = vmul.f32 %v1164, 1.442695
        %v1396 = vpow.pop %v1395
        %v1397 = vmul.f32 %v1165, 1.442695
        %v1398 = vpow.pop %v1397
        %v1399 = vmul.f32 %v1166, 1.442695
        %v1400 = vpow.pop %v1399
        %v1401 = vmul.f32 %v1167, 1.442695
        %v1402 = vpow.pop %v1401
        %v1403 = vmul.f32 %v1168, 1.442695
        %v1404 = vpow.pop %v1403
        %v1405 = vmul.f32 %v1169, 1.442695
        %v1406 = vpow.pop %v1405
        %v1407 = vmul.f32 %v1170, 1.442695
        %v1408 = vpow.pop %v1407
        %v1409 = vmul.f32 %v1171, 1.442695
        %v1410 = vpow.pop %v1409
        %v1411 = vmul.f32 %v1172, 1.442695
        %v1412 = vpow.pop %v1411
        %v1413 = vmul.f32 %v1173, 1.442695
        %v1414 = vpow.pop %v1413
        %v1415 = vmul.f32 %v1174, 1.442695
        %v1416 = vpow.pop %v1415
        %v1417 = vmul.f32 %v1175, 1.442695
        %v1418 = vpow.pop %v1417
        %v1419 = vmul.f32 %v1176, 1.442695
        %v1420 = vpow.pop %v1419
        %v1421 = vmul.f32 %v1177, 1.442695
        %v1422 = vpow.pop %v1421
        %v1423 = vmul.f32 %v1178, 1.442695
        %v1424 = vpow.pop %v1423
        %v1425 = vmul.f32 %v1179, 1.442695
        %v1426 = vpow.pop %v1425
        %v1427 = vmul.f32 %v1180, 1.442695
        %v1428 = vpow.pop %v1427
        %v1429 = vmul.f32 %v1181, 1.442695
        %v1430 = vpow.pop %v1429
        %v1431 = vmul.f32 %v1182, 1.442695
        %v1432 = vpow.pop %v1431
        %v1433 = vmul.f32 %v1183, 1.442695
        %v1434 = vpow.pop %v1433
        %v1435 = vmul.f32 %v1184, 1.442695
        %v1436 = vpow.pop %v1435
        %v1437 = vmul.f32 %v1185, 1.442695
        %v1438 = vpow.pop %v1437
        %v1439 = vmul.f32 %v1186, 1.442695
        %v1440 = vpow.pop %v1439
        %v1441 = vmul.f32 %v1187, 1.442695
        %v1442 = vpow.pop %v1441
        %v1443 = vmul.f32 %v1188, 1.442695
        %v1444 = vpow.pop %v1443
        %v1445 = vadd.f32 %v1190, 1.0
        %v1446 = vadd.f32 %v1192, 1.0
        %v1447 = vadd.f32 %v1194, 1.0
        %v1448 = vadd.f32 %v1196, 1.0
        %v1449 = vadd.f32 %v1198, 1.0
        %v1450 = vadd.f32 %v1200, 1.0
        %v1451 = vadd.f32 %v1202, 1.0
        %v1452 = vadd.f32 %v1204, 1.0
        %v1453 = vadd.f32 %v1206, 1.0
        %v1454 = vadd.f32 %v1208, 1.0
        %v1455 = vadd.f32 %v1210, 1.0
        %v1456 = vadd.f32 %v1212, 1.0
        %v1457 = vadd.f32 %v1214, 1.0
        %v1458 = vadd.f32 %v1216, 1.0
        %v1459 = vadd.f32 %v1218, 1.0
        %v1460 = vadd.f32 %v1220, 1.0
        %v1461 = vadd.f32 %v1222, 1.0
        %v1462 = vadd.f32 %v1224, 1.0
        %v1463 = vadd.f32 %v1226, 1.0
        %v1464 = vadd.f32 %v1228, 1.0
        %v1465 = vadd.f32 %v1230, 1.0
        %v1466 = vadd.f32 %v1232, 1.0
        %v1467 = vadd.f32 %v1234, 1.0
        %v1468 = vadd.f32 %v1236, 1.0
        %v1469 = vadd.f32 %v1238, 1.0
        %v1470 = vadd.f32 %v1240, 1.0
        %v1471 = vadd.f32 %v1242, 1.0
        %v1472 = vadd.f32 %v1244, 1.0
        %v1473 = vadd.f32 %v1246, 1.0
        %v1474 = vadd.f32 %v1248, 1.0
        %v1475 = vadd.f32 %v1250, 1.0
        %v1476 = vadd.f32 %v1252, 1.0
        %v1477 = vadd.f32 %v1254, 1.0
        %v1478 = vadd.f32 %v1256, 1.0
        %v1479 = vadd.f32 %v1258, 1.0
        %v1480 = vadd.f32 %v1260, 1.0
        %v1481 = vadd.f32 %v1262, 1.0
        %v1482 = vadd.f32 %v1264, 1.0
        %v1483 = vadd.f32 %v1266, 1.0
        %v1484 = vadd.f32 %v1268, 1.0
        %v1485 = vadd.f32 %v1270, 1.0
        %v1486 = vadd.f32 %v1272, 1.0
        %v1487 = vadd.f32 %v1274, 1.0
        %v1488 = vadd.f32 %v1276, 1.0
        %v1489 = vadd.f32 %v1278, 1.0
        %v1490 = vadd.f32 %v1280, 1.0
        %v1491 = vadd.f32 %v1282, 1.0
        %v1492 = vadd.f32 %v1284, 1.0
        %v1493 = vadd.f32 %v1286, 1.0
        %v1494 = vadd.f32 %v1288, 1.0
        %v1495 = vadd.f32 %v1290, 1.0
        %v1496 = vadd.f32 %v1292, 1.0
        %v1497 = vadd.f32 %v1294, 1.0
        %v1498 = vadd.f32 %v1296, 1.0
        %v1499 = vadd.f32 %v1298, 1.0
        %v1500 = vadd.f32 %v1300, 1.0
        %v1501 = vadd.f32 %v1302, 1.0
        %v1502 = vadd.f32 %v1304, 1.0
        %v1503 = vadd.f32 %v1306, 1.0
        %v1504 = vadd.f32 %v1308, 1.0
        %v1505 = vadd.f32 %v1310, 1.0
        %v1506 = vadd.f32 %v1312, 1.0
        %v1507 = vadd.f32 %v1314, 1.0
        %v1508 = vadd.f32 %v1316, 1.0
        %v1509 = vadd.f32 %v1318, 1.0
        %v1510 = vadd.f32 %v1320, 1.0
        %v1511 = vadd.f32 %v1322, 1.0
        %v1512 = vadd.f32 %v1324, 1.0
        %v1513 = vadd.f32 %v1326, 1.0
        %v1514 = vadd.f32 %v1328, 1.0
        %v1515 = vadd.f32 %v1330, 1.0
        %v1516 = vadd.f32 %v1332, 1.0
        %v1517 = vadd.f32 %v1334, 1.0
        %v1518 = vadd.f32 %v1336, 1.0
        %v1519 = vadd.f32 %v1338, 1.0
        %v1520 = vadd.f32 %v1340, 1.0
        %v1521 = vadd.f32 %v1342, 1.0
        %v1522 = vadd.f32 %v1344, 1.0
        %v1523 = vadd.f32 %v1346, 1.0
        %v1524 = vadd.f32 %v1348, 1.0
        %v1525 = vadd.f32 %v1350, 1.0
        %v1526 = vadd.f32 %v1352, 1.0
        %v1527 = vadd.f32 %v1354, 1.0
        %v1528 = vadd.f32 %v1356, 1.0
        %v1529 = vadd.f32 %v1358, 1.0
        %v1530 = vadd.f32 %v1360, 1.0
        %v1531 = vadd.f32 %v1362, 1.0
        %v1532 = vadd.f32 %v1364, 1.0
        %v1533 = vadd.f32 %v1366, 1.0
        %v1534 = vadd.f32 %v1368, 1.0
        %v1535 = vadd.f32 %v1370, 1.0
        %v1536 = vadd.f32 %v1372, 1.0
        %v1537 = vadd.f32 %v1374, 1.0
        %v1538 = vadd.f32 %v1376, 1.0
        %v1539 = vadd.f32 %v1378, 1.0
        %v1540 = vadd.f32 %v1380, 1.0
        %v1541 = vadd.f32 %v1382, 1.0
        %v1542 = vadd.f32 %v1384, 1.0
        %v1543 = vadd.f32 %v1386, 1.0
        %v1544 = vadd.f32 %v1388, 1.0
        %v1545 = vadd.f32 %v1390, 1.0
        %v1546 = vadd.f32 %v1392, 1.0
        %v1547 = vadd.f32 %v1394, 1.0
        %v1548 = vadd.f32 %v1396, 1.0
        %v1549 = vadd.f32 %v1398, 1.0
        %v1550 = vadd.f32 %v1400, 1.0
        %v1551 = vadd.f32 %v1402, 1.0
        %v1552 = vadd.f32 %v1404, 1.0
        %v1553 = vadd.f32 %v1406, 1.0
        %v1554 = vadd.f32 %v1408, 1.0
        %v1555 = vadd.f32 %v1410, 1.0
        %v1556 = vadd.f32 %v1412, 1.0
        %v1557 = vadd.f32 %v1414, 1.0
        %v1558 = vadd.f32 %v1416, 1.0
        %v1559 = vadd.f32 %v1418, 1.0
        %v1560 = vadd.f32 %v1420, 1.0
        %v1561 = vadd.f32 %v1422, 1.0
        %v1562 = vadd.f32 %v1424, 1.0
        %v1563 = vadd.f32 %v1426, 1.0
        %v1564 = vadd.f32 %v1428, 1.0
        %v1565 = vadd.f32 %v1430, 1.0
        %v1566 = vadd.f32 %v1432, 1.0
        %v1567 = vadd.f32 %v1434, 1.0
        %v1568 = vadd.f32 %v1436, 1.0
        %v1569 = vadd.f32 %v1438, 1.0
        %v1570 = vadd.f32 %v1440, 1.0
        %v1571 = vadd.f32 %v1442, 1.0
        %v1572 = vadd.f32 %v1444, 1.0
        %v1573 = vrcp.pop %v1445
        %v1574 = vrcp.pop %v1446
        %v1575 = vrcp.pop %v1447
        %v1576 = vrcp.pop %v1448
        %v1577 = vrcp.pop %v1449
        %v1578 = vrcp.pop %v1450
        %v1579 = vrcp.pop %v1451
        %v1580 = vrcp.pop %v1452
        %v1581 = vrcp.pop %v1453
        %v1582 = vrcp.pop %v1454
        %v1583 = vrcp.pop %v1455
        %v1584 = vrcp.pop %v1456
        %v1585 = vrcp.pop %v1457
        %v1586 = vrcp.pop %v1458
        %v1587 = vrcp.pop %v1459
        %v1588 = vrcp.pop %v1460
        %v1589 = vrcp.pop %v1461
        %v1590 = vrcp.pop %v1462
        %v1591 = vrcp.pop %v1463
        %v1592 = vrcp.pop %v1464
        %v1593 = vrcp.pop %v1465
        %v1594 = vrcp.pop %v1466
        %v1595 = vrcp.pop %v1467
        %v1596 = vrcp.pop %v1468
        %v1597 = vrcp.pop %v1469
        %v1598 = vrcp.pop %v1470
        %v1599 = vrcp.pop %v1471
        %v1600 = vrcp.pop %v1472
        %v1601 = vrcp.pop %v1473
        %v1602 = vrcp.pop %v1474
        %v1603 = vrcp.pop %v1475
        %v1604 = vrcp.pop %v1476
        %v1605 = vrcp.pop %v1477
        %v1606 = vrcp.pop %v1478
        %v1607 = vrcp.pop %v1479
        %v1608 = vrcp.pop %v1480
        %v1609 = vrcp.pop %v1481
        %v1610 = vrcp.pop %v1482
        %v1611 = vrcp.pop %v1483
        %v1612 = vrcp.pop %v1484
        %v1613 = vrcp.pop %v1485
        %v1614 = vrcp.pop %v1486
        %v1615 = vrcp.pop %v1487
        %v1616 = vrcp.pop %v1488
        %v1617 = vrcp.pop %v1489
        %v1618 = vrcp.pop %v1490
        %v1619 = vrcp.pop %v1491
        %v1620 = vrcp.pop %v1492
        %v1621 = vrcp.pop %v1493
        %v1622 = vrcp.pop %v1494
        %v1623 = vrcp.pop %v1495
        %v1624 = vrcp.pop %v1496
        %v1625 = vrcp.pop %v1497
        %v1626 = vrcp.pop %v1498
        %v1627 = vrcp.pop %v1499
        %v1628 = vrcp.pop %v1500
        %v1629 = vrcp.pop %v1501
        %v1630 = vrcp.pop %v1502
        %v1631 = vrcp.pop %v1503
        %v1632 = vrcp.pop %v1504
        %v1633 = vrcp.pop %v1505
        %v1634 = vrcp.pop %v1506
        %v1635 = vrcp.pop %v1507
        %v1636 = vrcp.pop %v1508
        %v1637 = vrcp.pop %v1509
        %v1638 = vrcp.pop %v1510
        %v1639 = vrcp.pop %v1511
        %v1640 = vrcp.pop %v1512
        %v1641 = vrcp.pop %v1513
        %v1642 = vrcp.pop %v1514
        %v1643 = vrcp.pop %v1515
        %v1644 = vrcp.pop %v1516
        %v1645 = vrcp.pop %v1517
        %v1646 = vrcp.pop %v1518
        %v1647 = vrcp.pop %v1519
        %v1648 = vrcp.pop %v1520
        %v1649 = vrcp.pop %v1521
        %v1650 = vrcp.pop %v1522
        %v1651 = vrcp.pop %v1523
        %v1652 = vrcp.pop %v1524
        %v1653 = vrcp.pop %v1525
        %v1654 = vrcp.pop %v1526
        %v1655 = vrcp.pop %v1527
        %v1656 = vrcp.pop %v1528
        %v1657 = vrcp.pop %v1529
        %v1658 = vrcp.pop %v1530
        %v1659 = vrcp.pop %v1531
        %v1660 = vrcp.pop %v1532
        %v1661 = vrcp.pop %v1533
        %v1662 = vrcp.pop %v1534
        %v1663 = vrcp.pop %v1535
        %v1664 = vrcp.pop %v1536
        %v1665 = vrcp.pop %v1537
        %v1666 = vrcp.pop %v1538
        %v1667 = vrcp.pop %v1539
        %v1668 = vrcp.pop %v1540
        %v1669 = vrcp.pop %v1541
        %v1670 = vrcp.pop %v1542
        %v1671 = vrcp.pop %v1543
        %v1672 = vrcp.pop %v1544
        %v1673 = vrcp.pop %v1545
        %v1674 = vrcp.pop %v1546
        %v1675 = vrcp.pop %v1547
        %v1676 = vrcp.pop %v1548
        %v1677 = vrcp.pop %v1549
        %v1678 = vrcp.pop %v1550
        %v1679 = vrcp.pop %v1551
        %v1680 = vrcp.pop %v1552
        %v1681 = vrcp.pop %v1553
        %v1682 = vrcp.pop %v1554
        %v1683 = vrcp.pop %v1555
        %v1684 = vrcp.pop %v1556
        %v1685 = vrcp.pop %v1557
        %v1686 = vrcp.pop %v1558
        %v1687 = vrcp.pop %v1559
        %v1688 = vrcp.pop %v1560
        %v1689 = vrcp.pop %v1561
        %v1690 = vrcp.pop %v1562
        %v1691 = vrcp.pop %v1563
        %v1692 = vrcp.pop %v1564
        %v1693 = vrcp.pop %v1565
        %v1694 = vrcp.pop %v1566
        %v1695 = vrcp.pop %v1567
        %v1696 = vrcp.pop %v1568
        %v1697 = vrcp.pop %v1569
        %v1698 = vrcp.pop %v1570
        %v1699 = vrcp.pop %v1571
        %v1700 = vrcp.pop %v1572
        %v1701 = vld [vmem:[%s254] sm:$0xff]
        %v1702 = vld [vmem:[%s254 + $0x8] sm:$0xff]
        %v1703 = vld [vmem:[%s254 + $0x10] sm:$0xff]
        %v1704 = vld [vmem:[%s254 + $0x18] sm:$0xff]
        %v1705 = vld [vmem:[%s254 + $0x20] sm:$0xff]
        %v1706 = vld [vmem:[%s254 + $0x28] sm:$0xff]
        %v1707 = vld [vmem:[%s254 + $0x30] sm:$0xff]
        %v1708 = vld [vmem:[%s254 + $0x38] sm:$0xff]
        %v1709 = vld [vmem:[%s254 + $0x40] sm:$0xff]
        %v1710 = vld [vmem:[%s254 + $0x48] sm:$0xff]
        %v1711 = vld [vmem:[%s254 + $0x50] sm:$0xff]
        %v1712 = vld [vmem:[%s254 + $0x58] sm:$0xff]
        %v1713 = vld [vmem:[%s254 + $0x60] sm:$0xff]
        %v1714 = vld [vmem:[%s254 + $0x68] sm:$0xff]
        %v1715 = vld [vmem:[%s254 + $0x70] sm:$0xff]
        %v1716 = vld [vmem:[%s254 + $0x78] sm:$0xff]
        %1718 = vset.pattern.permute.xlu0 0
        %1719 = vperm.xlu0 %1718, %v1701
        %v1720 = vpop.permute.xlu0 %1719
        %1723 = vset.pattern.permute.xlu0 0
        %1724 = vperm.xlu0 %1723, %v1702
        %v1725 = vpop.permute.xlu0 %1724
        %1728 = vset.pattern.permute.xlu0 0
        %1729 = vperm.xlu0 %1728, %v1703
        %v1730 = vpop.permute.xlu0 %1729
        %1733 = vset.pattern.permute.xlu0 0
        %1734 = vperm.xlu0 %1733, %v1704
        %v1735 = vpop.permute.xlu0 %1734
        %1738 = vset.pattern.permute.xlu0 0
        %1739 = vperm.xlu0 %1738, %v1705
        %v1740 = vpop.permute.xlu0 %1739
        %1743 = vset.pattern.permute.xlu0 0
        %1744 = vperm.xlu0 %1743, %v1706
        %v1745 = vpop.permute.xlu0 %1744
        %1748 = vset.pattern.permute.xlu0 0
        %1749 = vperm.xlu0 %1748, %v1707
        %v1750 = vpop.permute.xlu0 %1749
        %1753 = vset.pattern.permute.xlu0 0
        %1754 = vperm.xlu0 %1753, %v1708
        %v1755 = vpop.permute.xlu0 %1754
        %1758 = vset.pattern.permute.xlu0 0
        %1759 = vperm.xlu0 %1758, %v1709
        %v1760 = vpop.permute.xlu0 %1759
        %1763 = vset.pattern.permute.xlu0 0
        %1764 = vperm.xlu0 %1763, %v1710
        %v1765 = vpop.permute.xlu0 %1764
        %1768 = vset.pattern.permute.xlu0 0
        %1769 = vperm.xlu0 %1768, %v1711
        %v1770 = vpop.permute.xlu0 %1769
        %1773 = vset.pattern.permute.xlu0 0
        %1774 = vperm.xlu0 %1773, %v1712
        %v1775 = vpop.permute.xlu0 %1774
        %1778 = vset.pattern.permute.xlu0 0
        %1779 = vperm.xlu0 %1778, %v1713
        %v1780 = vpop.permute.xlu0 %1779
        %1783 = vset.pattern.permute.xlu0 0
        %1784 = vperm.xlu0 %1783, %v1714
        %v1785 = vpop.permute.xlu0 %1784
        %1788 = vset.pattern.permute.xlu0 0
        %1789 = vperm.xlu0 %1788, %v1715
        %v1790 = vpop.permute.xlu0 %1789
        %1793 = vset.pattern.permute.xlu0 0
        %1794 = vperm.xlu0 %1793, %v1716
        %v1795 = vpop.permute.xlu0 %1794
        %v1797 = vadd.f32 %v1720, %v1573
        %v1798 = vadd.f32 %v1720, %v1574
        %v1799 = vadd.f32 %v1720, %v1575
        %v1800 = vadd.f32 %v1720, %v1576
        %v1801 = vadd.f32 %v1720, %v1577
        %v1802 = vadd.f32 %v1720, %v1578
        %v1803 = vadd.f32 %v1720, %v1579
        %v1804 = vadd.f32 %v1720, %v1580
        %v1805 = vadd.f32 %v1725, %v1581
        %v1806 = vadd.f32 %v1725, %v1582
        %v1807 = vadd.f32 %v1725, %v1583
        %v1808 = vadd.f32 %v1725, %v1584
        %v1809 = vadd.f32 %v1725, %v1585
        %v1810 = vadd.f32 %v1725, %v1586
        %v1811 = vadd.f32 %v1725, %v1587
        %v1812 = vadd.f32 %v1725, %v1588
        %v1813 = vadd.f32 %v1730, %v1589
        %v1814 = vadd.f32 %v1730, %v1590
        %v1815 = vadd.f32 %v1730, %v1591
        %v1816 = vadd.f32 %v1730, %v1592
        %v1817 = vadd.f32 %v1730, %v1593
        %v1818 = vadd.f32 %v1730, %v1594
        %v1819 = vadd.f32 %v1730, %v1595
        %v1820 = vadd.f32 %v1730, %v1596
        %v1821 = vadd.f32 %v1735, %v1597
        %v1822 = vadd.f32 %v1735, %v1598
        %v1823 = vadd.f32 %v1735, %v1599
        %v1824 = vadd.f32 %v1735, %v1600
        %v1825 = vadd.f32 %v1735, %v1601
        %v1826 = vadd.f32 %v1735, %v1602
        %v1827 = vadd.f32 %v1735, %v1603
        %v1828 = vadd.f32 %v1735, %v1604
        %v1829 = vadd.f32 %v1740, %v1605
        %v1830 = vadd.f32 %v1740, %v1606
        %v1831 = vadd.f32 %v1740, %v1607
        %v1832 = vadd.f32 %v1740, %v1608
        %v1833 = vadd.f32 %v1740, %v1609
        %v1834 = vadd.f32 %v1740, %v1610
        %v1835 = vadd.f32 %v1740, %v1611
        %v1836 = vadd.f32 %v1740, %v1612
        %v1837 = vadd.f32 %v1745, %v1613
        %v1838 = vadd.f32 %v1745, %v1614
        %v1839 = vadd.f32 %v1745, %v1615
        %v1840 = vadd.f32 %v1745, %v1616
        %v1841 = vadd.f32 %v1745, %v1617
        %v1842 = vadd.f32 %v1745, %v1618
        %v1843 = vadd.f32 %v1745, %v1619
        %v1844 = vadd.f32 %v1745, %v1620
        %v1845 = vadd.f32 %v1750, %v1621
        %v1846 = vadd.f32 %v1750, %v1622
        %v1847 = vadd.f32 %v1750, %v1623
        %v1848 = vadd.f32 %v1750, %v1624
        %v1849 = vadd.f32 %v1750, %v1625
        %v1850 = vadd.f32 %v1750, %v1626
        %v1851 = vadd.f32 %v1750, %v1627
        %v1852 = vadd.f32 %v1750, %v1628
        %v1853 = vadd.f32 %v1755, %v1629
        %v1854 = vadd.f32 %v1755, %v1630
        %v1855 = vadd.f32 %v1755, %v1631
        %v1856 = vadd.f32 %v1755, %v1632
        %v1857 = vadd.f32 %v1755, %v1633
        %v1858 = vadd.f32 %v1755, %v1634
        %v1859 = vadd.f32 %v1755, %v1635
        %v1860 = vadd.f32 %v1755, %v1636
        %v1861 = vadd.f32 %v1760, %v1637
        %v1862 = vadd.f32 %v1760, %v1638
        %v1863 = vadd.f32 %v1760, %v1639
        %v1864 = vadd.f32 %v1760, %v1640
        %v1865 = vadd.f32 %v1760, %v1641
        %v1866 = vadd.f32 %v1760, %v1642
        %v1867 = vadd.f32 %v1760, %v1643
        %v1868 = vadd.f32 %v1760, %v1644
        %v1869 = vadd.f32 %v1765, %v1645
        %v1870 = vadd.f32 %v1765, %v1646
        %v1871 = vadd.f32 %v1765, %v1647
        %v1872 = vadd.f32 %v1765, %v1648
        %v1873 = vadd.f32 %v1765, %v1649
        %v1874 = vadd.f32 %v1765, %v1650
        %v1875 = vadd.f32 %v1765, %v1651
        %v1876 = vadd.f32 %v1765, %v1652
        %v1877 = vadd.f32 %v1770, %v1653
        %v1878 = vadd.f32 %v1770, %v1654
        %v1879 = vadd.f32 %v1770, %v1655
        %v1880 = vadd.f32 %v1770, %v1656
        %v1881 = vadd.f32 %v1770, %v1657
        %v1882 = vadd.f32 %v1770, %v1658
        %v1883 = vadd.f32 %v1770, %v1659
        %v1884 = vadd.f32 %v1770, %v1660
        %v1885 = vadd.f32 %v1775, %v1661
        %v1886 = vadd.f32 %v1775, %v1662
        %v1887 = vadd.f32 %v1775, %v1663
        %v1888 = vadd.f32 %v1775, %v1664
        %v1889 = vadd.f32 %v1775, %v1665
        %v1890 = vadd.f32 %v1775, %v1666
        %v1891 = vadd.f32 %v1775, %v1667
        %v1892 = vadd.f32 %v1775, %v1668
        %v1893 = vadd.f32 %v1780, %v1669
        %v1894 = vadd.f32 %v1780, %v1670
        %v1895 = vadd.f32 %v1780, %v1671
        %v1896 = vadd.f32 %v1780, %v1672
        %v1897 = vadd.f32 %v1780, %v1673
        %v1898 = vadd.f32 %v1780, %v1674
        %v1899 = vadd.f32 %v1780, %v1675
        %v1900 = vadd.f32 %v1780, %v1676
        %v1901 = vadd.f32 %v1785, %v1677
        %v1902 = vadd.f32 %v1785, %v1678
        %v1903 = vadd.f32 %v1785, %v1679
        %v1904 = vadd.f32 %v1785, %v1680
        %v1905 = vadd.f32 %v1785, %v1681
        %v1906 = vadd.f32 %v1785, %v1682
        %v1907 = vadd.f32 %v1785, %v1683
        %v1908 = vadd.f32 %v1785, %v1684
        %v1909 = vadd.f32 %v1790, %v1685
        %v1910 = vadd.f32 %v1790, %v1686
        %v1911 = vadd.f32 %v1790, %v1687
        %v1912 = vadd.f32 %v1790, %v1688
        %v1913 = vadd.f32 %v1790, %v1689
        %v1914 = vadd.f32 %v1790, %v1690
        %v1915 = vadd.f32 %v1790, %v1691
        %v1916 = vadd.f32 %v1790, %v1692
        %v1917 = vadd.f32 %v1795, %v1693
        %v1918 = vadd.f32 %v1795, %v1694
        %v1919 = vadd.f32 %v1795, %v1695
        %v1920 = vadd.f32 %v1795, %v1696
        %v1921 = vadd.f32 %v1795, %v1697
        %v1922 = vadd.f32 %v1795, %v1698
        %v1923 = vadd.f32 %v1795, %v1699
        %v1924 = vadd.f32 %v1795, %v1700
        %v1925 = vmul.f32 %v257, %v1797
        %v1926 = vmul.f32 %v258, %v1798
        %v1927 = vmul.f32 %v259, %v1799
        %v1928 = vmul.f32 %v260, %v1800
        %v1929 = vmul.f32 %v261, %v1801
        %v1930 = vmul.f32 %v262, %v1802
        %v1931 = vmul.f32 %v263, %v1803
        %v1932 = vmul.f32 %v264, %v1804
        %v1933 = vmul.f32 %v265, %v1805
        %v1934 = vmul.f32 %v266, %v1806
        %v1935 = vmul.f32 %v267, %v1807
        %v1936 = vmul.f32 %v268, %v1808
        %v1937 = vmul.f32 %v269, %v1809
        %v1938 = vmul.f32 %v270, %v1810
        %v1939 = vmul.f32 %v271, %v1811
        %v1940 = vmul.f32 %v272, %v1812
        %v1941 = vmul.f32 %v273, %v1813
        %v1942 = vmul.f32 %v274, %v1814
        %v1943 = vmul.f32 %v275, %v1815
        %v1944 = vmul.f32 %v276, %v1816
        %v1945 = vmul.f32 %v277, %v1817
        %v1946 = vmul.f32 %v278, %v1818
        %v1947 = vmul.f32 %v279, %v1819
        %v1948 = vmul.f32 %v280, %v1820
        %v1949 = vmul.f32 %v281, %v1821
        %v1950 = vmul.f32 %v282, %v1822
        %v1951 = vmul.f32 %v283, %v1823
        %v1952 = vmul.f32 %v284, %v1824
        %v1953 = vmul.f32 %v285, %v1825
        %v1954 = vmul.f32 %v286, %v1826
        %v1955 = vmul.f32 %v287, %v1827
        %v1956 = vmul.f32 %v288, %v1828
        %v1957 = vmul.f32 %v289, %v1829
        %v1958 = vmul.f32 %v290, %v1830
        %v1959 = vmul.f32 %v291, %v1831
        %v1960 = vmul.f32 %v292, %v1832
        %v1961 = vmul.f32 %v293, %v1833
        %v1962 = vmul.f32 %v294, %v1834
        %v1963 = vmul.f32 %v295, %v1835
        %v1964 = vmul.f32 %v296, %v1836
        %v1965 = vmul.f32 %v297, %v1837
        %v1966 = vmul.f32 %v298, %v1838
        %v1967 = vmul.f32 %v299, %v1839
        %v1968 = vmul.f32 %v300, %v1840
        %v1969 = vmul.f32 %v301, %v1841
        %v1970 = vmul.f32 %v302, %v1842
        %v1971 = vmul.f32 %v303, %v1843
        %v1972 = vmul.f32 %v304, %v1844
        %v1973 = vmul.f32 %v305, %v1845
        %v1974 = vmul.f32 %v306, %v1846
        %v1975 = vmul.f32 %v307, %v1847
        %v1976 = vmul.f32 %v308, %v1848
        %v1977 = vmul.f32 %v309, %v1849
        %v1978 = vmul.f32 %v310, %v1850
        %v1979 = vmul.f32 %v311, %v1851
        %v1980 = vmul.f32 %v312, %v1852
        %v1981 = vmul.f32 %v313, %v1853
        %v1982 = vmul.f32 %v314, %v1854
        %v1983 = vmul.f32 %v315, %v1855
        %v1984 = vmul.f32 %v316, %v1856
        %v1985 = vmul.f32 %v317, %v1857
        %v1986 = vmul.f32 %v318, %v1858
        %v1987 = vmul.f32 %v319, %v1859
        %v1988 = vmul.f32 %v320, %v1860
        %v1989 = vmul.f32 %v321, %v1861
        %v1990 = vmul.f32 %v322, %v1862
        %v1991 = vmul.f32 %v323, %v1863
        %v1992 = vmul.f32 %v324, %v1864
        %v1993 = vmul.f32 %v325, %v1865
        %v1994 = vmul.f32 %v326, %v1866
        %v1995 = vmul.f32 %v327, %v1867
        %v1996 = vmul.f32 %v328, %v1868
        %v1997 = vmul.f32 %v329, %v1869
        %v1998 = vmul.f32 %v330, %v1870
        %v1999 = vmul.f32 %v331, %v1871
        %v2000 = vmul.f32 %v332, %v1872
        %v2001 = vmul.f32 %v333, %v1873
        %v2002 = vmul.f32 %v334, %v1874
        %v2003 = vmul.f32 %v335, %v1875
        %v2004 = vmul.f32 %v336, %v1876
        %v2005 = vmul.f32 %v337, %v1877
        %v2006 = vmul.f32 %v338, %v1878
        %v2007 = vmul.f32 %v339, %v1879
        %v2008 = vmul.f32 %v340, %v1880
        %v2009 = vmul.f32 %v341, %v1881
        %v2010 = vmul.f32 %v342, %v1882
        %v2011 = vmul.f32 %v343, %v1883
        %v2012 = vmul.f32 %v344, %v1884
        %v2013 = vmul.f32 %v345, %v1885
        %v2014 = vmul.f32 %v346, %v1886
        %v2015 = vmul.f32 %v347, %v1887
        %v2016 = vmul.f32 %v348, %v1888
        %v2017 = vmul.f32 %v349, %v1889
        %v2018 = vmul.f32 %v350, %v1890
        %v2019 = vmul.f32 %v351, %v1891
        %v2020 = vmul.f32 %v352, %v1892
        %v2021 = vmul.f32 %v353, %v1893
        %v2022 = vmul.f32 %v354, %v1894
        %v2023 = vmul.f32 %v355, %v1895
        %v2024 = vmul.f32 %v356, %v1896
        %v2025 = vmul.f32 %v357, %v1897
        %v2026 = vmul.f32 %v358, %v1898
        %v2027 = vmul.f32 %v359, %v1899
        %v2028 = vmul.f32 %v360, %v1900
        %v2029 = vmul.f32 %v361, %v1901
        %v2030 = vmul.f32 %v362, %v1902
        %v2031 = vmul.f32 %v363, %v1903
        %v2032 = vmul.f32 %v364, %v1904
        %v2033 = vmul.f32 %v365, %v1905
        %v2034 = vmul.f32 %v366, %v1906
        %v2035 = vmul.f32 %v367, %v1907
        %v2036 = vmul.f32 %v368, %v1908
        %v2037 = vmul.f32 %v369, %v1909
        %v2038 = vmul.f32 %v370, %v1910
        %v2039 = vmul.f32 %v371, %v1911
        %v2040 = vmul.f32 %v372, %v1912
        %v2041 = vmul.f32 %v373, %v1913
        %v2042 = vmul.f32 %v374, %v1914
        %v2043 = vmul.f32 %v375, %v1915
        %v2044 = vmul.f32 %v376, %v1916
        %v2045 = vmul.f32 %v377, %v1917
        %v2046 = vmul.f32 %v378, %v1918
        %v2047 = vmul.f32 %v379, %v1919
        %v2048 = vmul.f32 %v380, %v1920
        %v2049 = vmul.f32 %v381, %v1921
        %v2050 = vmul.f32 %v382, %v1922
        %v2051 = vmul.f32 %v383, %v1923
        %v2052 = vmul.f32 %v384, %v1924
        %2053 = vst [vmem:[%s248] sm:$0xff] %v1925
        %2054 = vst [vmem:[%s248 + $0x8] sm:$0xff] %v1926
        %2055 = vst [vmem:[%s248 + $0x10] sm:$0xff] %v1927
        %2056 = vst [vmem:[%s248 + $0x18] sm:$0xff] %v1928
        %2057 = vst [vmem:[%s248 + $0x20] sm:$0xff] %v1929
        %2058 = vst [vmem:[%s248 + $0x28] sm:$0xff] %v1930
        %2059 = vst [vmem:[%s248 + $0x30] sm:$0xff] %v1931
        %2060 = vst [vmem:[%s248 + $0x38] sm:$0xff] %v1932
        %2061 = vst [vmem:[%s248 + $0x40] sm:$0xff] %v1933
        %2062 = vst [vmem:[%s248 + $0x48] sm:$0xff] %v1934
        %2063 = vst [vmem:[%s248 + $0x50] sm:$0xff] %v1935
        %2064 = vst [vmem:[%s248 + $0x58] sm:$0xff] %v1936
        %2065 = vst [vmem:[%s248 + $0x60] sm:$0xff] %v1937
        %2066 = vst [vmem:[%s248 + $0x68] sm:$0xff] %v1938
        %2067 = vst [vmem:[%s248 + $0x70] sm:$0xff] %v1939
        %2068 = vst [vmem:[%s248 + $0x78] sm:$0xff] %v1940
        %2069 = vst [vmem:[%s248 + $0x80] sm:$0xff] %v1941
        %2070 = vst [vmem:[%s248 + $0x88] sm:$0xff] %v1942
        %2071 = vst [vmem:[%s248 + $0x90] sm:$0xff] %v1943
        %2072 = vst [vmem:[%s248 + $0x98] sm:$0xff] %v1944
        %2073 = vst [vmem:[%s248 + $0xa0] sm:$0xff] %v1945
        %2074 = vst [vmem:[%s248 + $0xa8] sm:$0xff] %v1946
        %2075 = vst [vmem:[%s248 + $0xb0] sm:$0xff] %v1947
        %2076 = vst [vmem:[%s248 + $0xb8] sm:$0xff] %v1948
        %2077 = vst [vmem:[%s248 + $0xc0] sm:$0xff] %v1949
        %2078 = vst [vmem:[%s248 + $0xc8] sm:$0xff] %v1950
        %2079 = vst [vmem:[%s248 + $0xd0] sm:$0xff] %v1951
        %2080 = vst [vmem:[%s248 + $0xd8] sm:$0xff] %v1952
        %2081 = vst [vmem:[%s248 + $0xe0] sm:$0xff] %v1953
        %2082 = vst [vmem:[%s248 + $0xe8] sm:$0xff] %v1954
        %2083 = vst [vmem:[%s248 + $0xf0] sm:$0xff] %v1955
        %2084 = vst [vmem:[%s248 + $0xf8] sm:$0xff] %v1956
        %2085 = vst [vmem:[%s248 + $0x100] sm:$0xff] %v1957
        %2086 = vst [vmem:[%s248 + $0x108] sm:$0xff] %v1958
        %2087 = vst [vmem:[%s248 + $0x110] sm:$0xff] %v1959
        %2088 = vst [vmem:[%s248 + $0x118] sm:$0xff] %v1960
        %2089 = vst [vmem:[%s248 + $0x120] sm:$0xff] %v1961
        %2090 = vst [vmem:[%s248 + $0x128] sm:$0xff] %v1962
        %2091 = vst [vmem:[%s248 + $0x130] sm:$0xff] %v1963
        %2092 = vst [vmem:[%s248 + $0x138] sm:$0xff] %v1964
        %2093 = vst [vmem:[%s248 + $0x140] sm:$0xff] %v1965
        %2094 = vst [vmem:[%s248 + $0x148] sm:$0xff] %v1966
        %2095 = vst [vmem:[%s248 + $0x150] sm:$0xff] %v1967
        %2096 = vst [vmem:[%s248 + $0x158] sm:$0xff] %v1968
        %2097 = vst [vmem:[%s248 + $0x160] sm:$0xff] %v1969
        %2098 = vst [vmem:[%s248 + $0x168] sm:$0xff] %v1970
        %2099 = vst [vmem:[%s248 + $0x170] sm:$0xff] %v1971
        %2100 = vst [vmem:[%s248 + $0x178] sm:$0xff] %v1972
        %2101 = vst [vmem:[%s248 + $0x180] sm:$0xff] %v1973
        %2102 = vst [vmem:[%s248 + $0x188] sm:$0xff] %v1974
        %2103 = vst [vmem:[%s248 + $0x190] sm:$0xff] %v1975
        %2104 = vst [vmem:[%s248 + $0x198] sm:$0xff] %v1976
        %2105 = vst [vmem:[%s248 + $0x1a0] sm:$0xff] %v1977
        %2106 = vst [vmem:[%s248 + $0x1a8] sm:$0xff] %v1978
        %2107 = vst [vmem:[%s248 + $0x1b0] sm:$0xff] %v1979
        %2108 = vst [vmem:[%s248 + $0x1b8] sm:$0xff] %v1980
        %2109 = vst [vmem:[%s248 + $0x1c0] sm:$0xff] %v1981
        %2110 = vst [vmem:[%s248 + $0x1c8] sm:$0xff] %v1982
        %2111 = vst [vmem:[%s248 + $0x1d0] sm:$0xff] %v1983
        %2112 = vst [vmem:[%s248 + $0x1d8] sm:$0xff] %v1984
        %2113 = vst [vmem:[%s248 + $0x1e0] sm:$0xff] %v1985
        %2114 = vst [vmem:[%s248 + $0x1e8] sm:$0xff] %v1986
        %2115 = vst [vmem:[%s248 + $0x1f0] sm:$0xff] %v1987
        %2116 = vst [vmem:[%s248 + $0x1f8] sm:$0xff] %v1988
        %2117 = vst [vmem:[%s248 + $0x200] sm:$0xff] %v1989
        %2118 = vst [vmem:[%s248 + $0x208] sm:$0xff] %v1990
        %2119 = vst [vmem:[%s248 + $0x210] sm:$0xff] %v1991
        %2120 = vst [vmem:[%s248 + $0x218] sm:$0xff] %v1992
        %2121 = vst [vmem:[%s248 + $0x220] sm:$0xff] %v1993
        %2122 = vst [vmem:[%s248 + $0x228] sm:$0xff] %v1994
        %2123 = vst [vmem:[%s248 + $0x230] sm:$0xff] %v1995
        %2124 = vst [vmem:[%s248 + $0x238] sm:$0xff] %v1996
        %2125 = vst [vmem:[%s248 + $0x240] sm:$0xff] %v1997
        %2126 = vst [vmem:[%s248 + $0x248] sm:$0xff] %v1998
        %2127 = vst [vmem:[%s248 + $0x250] sm:$0xff] %v1999
        %2128 = vst [vmem:[%s248 + $0x258] sm:$0xff] %v2000
        %2129 = vst [vmem:[%s248 + $0x260] sm:$0xff] %v2001
        %2130 = vst [vmem:[%s248 + $0x268] sm:$0xff] %v2002
        %2131 = vst [vmem:[%s248 + $0x270] sm:$0xff] %v2003
        %2132 = vst [vmem:[%s248 + $0x278] sm:$0xff] %v2004
        %2133 = vst [vmem:[%s248 + $0x280] sm:$0xff] %v2005
        %2134 = vst [vmem:[%s248 + $0x288] sm:$0xff] %v2006
        %2135 = vst [vmem:[%s248 + $0x290] sm:$0xff] %v2007
        %2136 = vst [vmem:[%s248 + $0x298] sm:$0xff] %v2008
        %2137 = vst [vmem:[%s248 + $0x2a0] sm:$0xff] %v2009
        %2138 = vst [vmem:[%s248 + $0x2a8] sm:$0xff] %v2010
        %2139 = vst [vmem:[%s248 + $0x2b0] sm:$0xff] %v2011
        %2140 = vst [vmem:[%s248 + $0x2b8] sm:$0xff] %v2012
        %2141 = vst [vmem:[%s248 + $0x2c0] sm:$0xff] %v2013
        %2142 = vst [vmem:[%s248 + $0x2c8] sm:$0xff] %v2014
        %2143 = vst [vmem:[%s248 + $0x2d0] sm:$0xff] %v2015
        %2144 = vst [vmem:[%s248 + $0x2d8] sm:$0xff] %v2016
        %2145 = vst [vmem:[%s248 + $0x2e0] sm:$0xff] %v2017
        %2146 = vst [vmem:[%s248 + $0x2e8] sm:$0xff] %v2018
        %2147 = vst [vmem:[%s248 + $0x2f0] sm:$0xff] %v2019
        %2148 = vst [vmem:[%s248 + $0x2f8] sm:$0xff] %v2020
        %2149 = vst [vmem:[%s248 + $0x300] sm:$0xff] %v2021
        %2150 = vst [vmem:[%s248 + $0x308] sm:$0xff] %v2022
        %2151 = vst [vmem:[%s248 + $0x310] sm:$0xff] %v2023
        %2152 = vst [vmem:[%s248 + $0x318] sm:$0xff] %v2024
        %2153 = vst [vmem:[%s248 + $0x320] sm:$0xff] %v2025
        %2154 = vst [vmem:[%s248 + $0x328] sm:$0xff] %v2026
        %2155 = vst [vmem:[%s248 + $0x330] sm:$0xff] %v2027
        %2156 = vst [vmem:[%s248 + $0x338] sm:$0xff] %v2028
        %2157 = vst [vmem:[%s248 + $0x340] sm:$0xff] %v2029
        %2158 = vst [vmem:[%s248 + $0x348] sm:$0xff] %v2030
        %2159 = vst [vmem:[%s248 + $0x350] sm:$0xff] %v2031
        %2160 = vst [vmem:[%s248 + $0x358] sm:$0xff] %v2032
        %2161 = vst [vmem:[%s248 + $0x360] sm:$0xff] %v2033
        %2162 = vst [vmem:[%s248 + $0x368] sm:$0xff] %v2034
        %2163 = vst [vmem:[%s248 + $0x370] sm:$0xff] %v2035
        %2164 = vst [vmem:[%s248 + $0x378] sm:$0xff] %v2036
        %2165 = vst [vmem:[%s248 + $0x380] sm:$0xff] %v2037
        %2166 = vst [vmem:[%s248 + $0x388] sm:$0xff] %v2038
        %2167 = vst [vmem:[%s248 + $0x390] sm:$0xff] %v2039
        %2168 = vst [vmem:[%s248 + $0x398] sm:$0xff] %v2040
        %2169 = vst [vmem:[%s248 + $0x3a0] sm:$0xff] %v2041
        %2170 = vst [vmem:[%s248 + $0x3a8] sm:$0xff] %v2042
        %2171 = vst [vmem:[%s248 + $0x3b0] sm:$0xff] %v2043
        %2172 = vst [vmem:[%s248 + $0x3b8] sm:$0xff] %v2044
        %2173 = vst [vmem:[%s248 + $0x3c0] sm:$0xff] %v2045
        %2174 = vst [vmem:[%s248 + $0x3c8] sm:$0xff] %v2046
        %2175 = vst [vmem:[%s248 + $0x3d0] sm:$0xff] %v2047
        %2176 = vst [vmem:[%s248 + $0x3d8] sm:$0xff] %v2048
        %2177 = vst [vmem:[%s248 + $0x3e0] sm:$0xff] %v2049
        %2178 = vst [vmem:[%s248 + $0x3e8] sm:$0xff] %v2050
        %2179 = vst [vmem:[%s248 + $0x3f0] sm:$0xff] %v2051
        %2180 = vst [vmem:[%s248 + $0x3f8] sm:$0xff] %v2052
        %s2181 = sand.u32 %s139, 1
        %s2182 = scalar_lea.sflag [#allocation4], %s2181
        %s2183 = sand.u32 %s139, 1
        %s2184 = smul.addr %s2183, 1024
        %s2185 = scalar_lea.vmem [#allocation5], %s2184
        // Predicated region
        $region41: #{tpu_custom_call.1} parent=35 // pred_check
          %p2186 = pneg %p149
        $region42: #{tpu_custom_call.1} parent=35 // pred_check_branch
          %2188 = sbr.rel (%p2186) target = $region44
        $region43: #{tpu_custom_call.1} parent=35 // pred_region
          %s2189 = smul.u32 8, %s26
          %s2191 = ssub.s32 16384, 16384
          %2192 = vsyncadd %s2182, %s2191
          %s2193 = smul.addr %s25, 128
          %s2194 = sadd.s32 %s2189, %s2193
          %s2195 = smul.addr %s2194, 128
          %s2196 = scalar_lea.hbm %s4, %s2195
          %s2197 = sshll.u32 %s2185, 4
          %s2198 = int_to_ptr.vmem [resolvable:$true] %s2197
          %2203 = dma.vmem_to_hbm [thread:$0]  %s2198, 16384, %s2196, %s2182, 1024, 1024, 64
        $region44: #{tpu_custom_call.1} parent=35 // pred_fallthru
          _
      $region36: #{tpu_custom_call.1} parent=5 // pred_fallthru
        _
      %p2204 = scmp.le.s32.totalorder 2, %s16
      // Predicated region
      $region45: #{tpu_custom_call.1} parent=5 // pred_check
        %p2205 = pneg %p2204
      $region46: #{tpu_custom_call.1} parent=5 // pred_check_branch
        %2207 = sbr.rel (%p2205) target = $region48
      $region47: #{tpu_custom_call.1} parent=5 // pred_region
        %s2208 = ssub.s32 %s16, 2
        // Predicated region
        $region49: #{tpu_custom_call.1} parent=47 // pred_check
          %p2209 = pneg %p155
        $region50: #{tpu_custom_call.1} parent=47 // pred_check_branch
          %2211 = sbr.rel (%p2209) target = $region52
        $region51: #{tpu_custom_call.1} parent=47 // pred_region
          %s2212 = sand.u32 %s140, 1
          %s2213 = scalar_lea.sflag [#allocation4], %s2212
          %s2214 = sand.u32 %s140, 1
          %s2215 = smul.addr %s2214, 1024
          %s2216 = scalar_lea.vmem [#allocation5], %s2215
          %2217 = dma.done %s2213, 16384
        $region52: #{tpu_custom_call.1} parent=47 // pred_fallthru
          _
      $region48: #{tpu_custom_call.1} parent=5 // pred_fallthru
        _
    $region6: #{tpu_custom_call.1} parent=1 // loop_footer
      %s20 = sadd.s32 1, %s16
    $region7: #{tpu_custom_call.1} parent=1 // loop_footer_branch
      %15 = sbr.rel target = $region3
    $region8: #{tpu_custom_call.1} parent=1 // loop_exit
      _
    %2218 = vsyncpa [#allocation3], 1
    %s2219 = scalar_lea.sflag [#allocation3], 1
    %2220 = vsyncpa %s2219, 1
    %2221 = vsyncpa [#allocation4], 1
    %s2222 = scalar_lea.sflag [#allocation4], 1
    %2223 = vsyncpa %s2222, 1

</llo_original>
